<compile_context>
chip_gen: v5e
topology: v5e:2x2
jax: 0.10.0
libtpu: 0.0.40
codegen_flags: <defaults>
</compile_context>

<pallas_src>
import jax
import jax.numpy as jnp
from jax import lax
from jax.experimental import pallas as pl
from jax.experimental.pallas import tpu as pltpu

# ----- module constants (from puzzle/fosae.py) -----
A = 1
LAYER_SIZE = 300
N = 9
U = 9
BASE_SIZE = 1                               # small test size
N_OBJ_FEATURE = (BASE_SIZE * 3) ** 2        # = 9
BN_EPS = 1e-5

F = N_OBJ_FEATURE
UNF = U * N * F                             # conv1 "kernel" = full flattened length (729)
UL = U * LAYER_SIZE                         # conv1 out channels (2700)
UAN = U * A * N                             # conv2 out channels == logits width (81)
UAF = U * A * F                             # attention output width (81)


def _round_up(x, m):
    return (x + m - 1) // m * m


UNF_PAD = _round_up(UNF, 128)               # 768 : lane-aligned matmul K dim
UAN_PAD = _round_up(UAN, 128)               # 128 : lane-dense logits / gumbel noise
OUT_PAD = _round_up(UAF, 128)               # 128 : lane-dense output -> unmasked stores


# ---------------- fused kernel: folded MLP + gumbel-softmax + attention ----------------
def _fused_kernel(x_ref, g_ref, w_ref, b_ref, tinv_ref, o_ref):
    # x_ref : (TB, UNF_PAD) f32   flattened input, layout [u, n, f], zero lane-padded
    # g_ref : (TB, UAN_PAD) f32   gumbel noise,    layout [u, a, n], zero lane-padded
    # w_ref : (UNF_PAD, UAN_PAD) bf16  folded conv1∘BN∘conv2 weight (VMEM-resident)
    # b_ref : (1, UAN_PAD)  f32   folded bias      (VMEM-resident)
    # tinv  : (1,) f32 in SMEM    1 / temperature
    # o_ref : (TB, OUT_PAD) f32   attention output, layout [u, a, f], lane-dense
    tb = x_ref.shape[0]
    x = x_ref[...]

    # conv1 -> BN(eval) -> dropout(id) -> conv2 folded to one MXU matmul (bf16 in, f32 acc).
    logits = jnp.dot(x.astype(jnp.bfloat16), w_ref[...],
                     preferred_element_type=jnp.float32)          # (TB, UAN_PAD)
    y = (logits + b_ref[...] + g_ref[...]) * tinv_ref[0]          # (logits + gumbel) / temp

    # One-hot scatter matrices: group grp's F outputs land at lanes [grp*F, grp*F+F)
    # of the 128-wide output via a tiny MXU matmul -> single unmasked lane-dense store.
    row = lax.broadcasted_iota(jnp.int32, (F, OUT_PAD), 0)
    col = lax.broadcasted_iota(jnp.int32, (F, OUT_PAD), 1)

    out = jnp.zeros((tb, OUT_PAD), jnp.float32)
    for grp in range(U * A):                   # static unroll: 9 (u, a) groups
        u = grp // A                           # A-expansion by indexing (no jnp.repeat copy)
        # soft gumbel-softmax over the N = 9 logits of this group
        yg = y[:, grp * N:(grp + 1) * N]                           # (TB, N)
        mg = jnp.max(yg, axis=-1, keepdims=True)
        eg = jnp.exp(yg - mg)
        pg = eg * pl.reciprocal(jnp.sum(eg, axis=-1, keepdims=True), approx=True)
        # attention-weighted sum over the N objects of unit u (input already in VMEM)
        base = u * N * F
        acc = jnp.zeros((tb, F), jnp.float32)
        for n in range(N):                     # static unroll: N = 9
            acc = acc + pg[:, n:n + 1] * x[:, base + n * F: base + (n + 1) * F]
        sg = (col == grp * F + row).astype(jnp.float32)            # (F, OUT_PAD) one-hot
        out = out + jnp.dot(acc, sg, preferred_element_type=jnp.float32)

    o_ref[...] = out                            # one unmasked 128-lane store per row tile


# ---------------- eval-mode weight folding (once per weight set) ----------------
def fold_params(params):
    scale = params["bn_gamma"] * lax.rsqrt(params["bn_var"] + BN_EPS)
    shift = params["bn_beta"] - params["bn_mean"] * scale
    w_eff = (params["w1"] * scale[None, :]) @ params["w2"]                 # (UNF, UAN)
    b_eff = (params["b1"] * scale + shift) @ params["w2"] + params["b2"]   # (UAN,)
    w_pad = jnp.zeros((UNF_PAD, UAN_PAD), jnp.float32).at[:UNF, :UAN].set(w_eff)
    b_pad = jnp.zeros((1, UAN_PAD), jnp.float32).at[0, :UAN].set(b_eff)
    return {"w_eff": w_pad.astype(jnp.bfloat16),   # bf16: MXU-native, half the HBM bytes
            "b_eff": b_pad}


# ---------------- wrapper ----------------
def attention_encoder_forward(folded, x, temp, gumbel_noise):
    """x: (B, U, N, F) f32, gumbel_noise: (B, U, A, N) f32, temp: scalar."""
    B = x.shape[0]

    # Batch tile: multiple of 8 sublanes, up to 256 MXU rows (v6e/v7x friendly).
    # At TB=256 the double-buffered working set is ~2.5 MB, far under v7x's 64 MiB VMEM.
    TB = min(256, _round_up(B, 8))
    B_pad = _round_up(B, TB)

    x_p = jnp.zeros((B_pad, UNF_PAD), jnp.float32).at[:B, :UNF].set(x.reshape(B, UNF))
    g_p = jnp.zeros((B_pad, UAN_PAD), jnp.float32).at[:B, :UAN].set(
        gumbel_noise.reshape(B, UAN))
    tinv = (1.0 / jnp.asarray(temp, jnp.float32)).reshape((1,))   # kernel multiplies

    out_pad = pl.pallas_call(
        _fused_kernel,
        out_shape=jax.ShapeDtypeStruct((B_pad, OUT_PAD), jnp.float32),
        grid=(B_pad // TB,),
        in_specs=[
            pl.BlockSpec((TB, UNF_PAD), lambda i: (i, 0)),         # x (pipelined over B)
            pl.BlockSpec((TB, UAN_PAD), lambda i: (i, 0)),         # gumbel noise
            pl.BlockSpec((UNF_PAD, UAN_PAD), lambda i: (0, 0)),    # folded weight (resident)
            pl.BlockSpec((1, UAN_PAD), lambda i: (0, 0)),          # folded bias   (resident)
            pl.BlockSpec(memory_space=pltpu.MemorySpace.SMEM),     # 1/temp scalar
        ],
        out_specs=pl.BlockSpec((TB, OUT_PAD), lambda i: (i, 0)),
        compiler_params=pltpu.CompilerParams(
            dimension_semantics=("parallel",)),                    # megacore / dual-TC over B
        cost_estimate=pl.CostEstimate(
            flops=2 * B_pad * UNF_PAD * UAN_PAD + 2 * B_pad * UAF * F,
            transcendentals=B_pad * UAN,
            bytes_accessed=4 * (x_p.size + g_p.size + B_pad * OUT_PAD)
            + 2 * UNF_PAD * UAN_PAD + 4 * UAN_PAD),
    )(x_p, g_p, folded["w_eff"], folded["b_eff"], tinv)

    return out_pad[:B, :UAF].reshape(B, U, A, F)


# ---------------- pure-JAX reference (unfused, f32) ----------------
def _reference_forward(params, x, temp, gumbel_noise):
    B = x.shape[0]
    xf = x.reshape(B, UNF)
    scale = params["bn_gamma"] / jnp.sqrt(params["bn_var"] + BN_EPS)
    shift = params["bn_beta"] - params["bn_mean"] * scale
    h = xf @ params["w1"] + params["b1"]                 # conv1 (dense)
    h = h * scale + shift                                # BN eval; dropout eval = identity
    logits = (h @ params["w2"] + params["b2"]).reshape(B, U, A, N)   # conv2 (dense)
    p = jax.nn.softmax((logits + gumbel_noise) / temp, axis=-1)      # soft gumbel-softmax
    return jnp.sum(p[..., None] * x[:, :, None, :, :], axis=3)       # (B, U, A, F)


# ---------------- deterministic parameter init ----------------
def init_params(key):
    ks = jax.random.split(key, 8)
    # conv1.weight: (U*L, U, N*F)  -> dense (U*N*F, U*L)
    w1_conv = jax.random.normal(ks[0], (UL, U, N * N_OBJ_FEATURE), jnp.float32) * 0.02
    # conv2.weight: (U*A*N, U, LAYER_SIZE) -> dense (U*L, U*A*N)
    w2_conv = jax.random.normal(ks[1], (UAN, U, LAYER_SIZE), jnp.float32) * 0.02
    return dict(
        w1=w1_conv.reshape(UL, UNF).T,
        b1=jax.random.normal(ks[2], (UL,), jnp.float32) * 0.01,
        w2=w2_conv.reshape(UAN, UL).T,
        b2=jax.random.normal(ks[3], (UAN,), jnp.float32) * 0.01,
        bn_gamma=1.0 + 0.1 * jax.random.normal(ks[4], (UL,), jnp.float32),
        bn_beta=0.1 * jax.random.normal(ks[5], (UL,), jnp.float32),
        bn_mean=0.1 * jax.random.normal(ks[6], (UL,), jnp.float32),
        bn_var=jnp.abs(jax.random.normal(ks[7], (UL,), jnp.float32)) + 0.5,
    )


if __name__ == "__main__":
    key = jax.random.PRNGKey(0)
    kp, kx, kg = jax.random.split(key, 3)

    B = 2
    params = init_params(kp)
    folded = fold_params(params)                       # once per weight set (eval mode)

    x = jax.random.normal(kx, (B, U, N, N_OBJ_FEATURE), jnp.float32)
    # deterministic gumbel noise: -log(-log(u + eps) + eps)
    eps = 1e-20
    ug = jax.random.uniform(kg, (B, U, A, N), jnp.float32)
    gumbel_noise = -jnp.log(-jnp.log(ug + eps) + eps)
    temp = 1.0

    fwd = jax.jit(attention_encoder_forward)
    out = jax.block_until_ready(fwd(folded, x, temp, gumbel_noise))

    assert out.shape == (B, U, A, N_OBJ_FEATURE)
    assert bool(jnp.all(jnp.isfinite(out)))

    ref = _reference_forward(params, x, temp, gumbel_noise)
    max_err = float(jnp.max(jnp.abs(out - ref)))
    assert max_err < 1e-1, f"max |kernel - reference| = {max_err}"

    print("KERNEL_OK")
</pallas_src>

<mosaic_0001>
module attributes {stable_mosaic.version = 11 : i64} {
  func.func @_fused_kernel(%arg0: i32, %arg1: memref<8x768xf32, #tpu.memory_space<vmem>>, %arg2: memref<8x128xf32, #tpu.memory_space<vmem>>, %arg3: memref<768x128xbf16, #tpu.memory_space<vmem>>, %arg4: memref<1x128xf32, #tpu.memory_space<vmem>>, %arg5: memref<1xf32, #tpu.memory_space<smem>>, %arg6: memref<8x128xf32, #tpu.memory_space<vmem>>) attributes {dimension_semantics = [#tpu.dimension_semantics<parallel>], iteration_bounds = array<i64: 1>, scalar_prefetch = 0 : i64, scratch_operands = 0 : i64, tpu.core_type = #tpu.core_type<tc>, window_params = [{transform_indices = @transform_0, window_bounds = array<i64: 8, 768>}, {transform_indices = @transform_1, window_bounds = array<i64: 8, 128>}, {pipeline_mode = #tpu.pipeline_mode<synchronous>, transform_indices = @transform_2, window_bounds = array<i64: 768, 128>}, {pipeline_mode = #tpu.pipeline_mode<synchronous>, transform_indices = @transform_3, window_bounds = array<i64: 1, 128>}, {transform_indices = @transform_4, window_bounds = array<i64: 1>}, {transform_indices = @transform_5, window_bounds = array<i64: 8, 128>}]} {
    %c0 = arith.constant 0 : index
    %c0_0 = arith.constant 0 : index
    %0 = vector.load %arg1[%c0, %c0_0] : memref<8x768xf32, #tpu.memory_space<vmem>>, vector<8x768xf32>
    %1 = arith.truncf %0 : vector<8x768xf32> to vector<8x768xbf16>
    %c0_1 = arith.constant 0 : index
    %c0_2 = arith.constant 0 : index
    %2 = vector.load %arg3[%c0_1, %c0_2] : memref<768x128xbf16, #tpu.memory_space<vmem>>, vector<768x128xbf16>
    %cst = arith.constant dense<0.000000e+00> : vector<8x128xf32>
    %3 = tpu.matmul %1, %2, %cst {dimension_numbers = #tpu.dot_dimension_numbers<[1], [0], [0], [1], [0, 0, 1, 1], [], []>} : vector<8x768xbf16>, vector<768x128xbf16>, vector<8x128xf32> -> vector<8x128xf32>
    %c0_3 = arith.constant 0 : index
    %c0_4 = arith.constant 0 : index
    %4 = vector.load %arg4[%c0_3, %c0_4] : memref<1x128xf32, #tpu.memory_space<vmem>>, vector<1x128xf32>
    %5 = vector.broadcast %4 : vector<1x128xf32> to vector<8x128xf32>
    %6 = arith.addf %3, %5 : vector<8x128xf32>
    %c0_5 = arith.constant 0 : index
    %c0_6 = arith.constant 0 : index
    %7 = vector.load %arg2[%c0_5, %c0_6] : memref<8x128xf32, #tpu.memory_space<vmem>>, vector<8x128xf32>
    %8 = arith.addf %6, %7 : vector<8x128xf32>
    %c0_7 = arith.constant 0 : index
    %9 = memref.load %arg5[%c0_7] : memref<1xf32, #tpu.memory_space<smem>>
    %10 = vector.broadcast %9 : f32 to vector<8x128xf32>
    %11 = arith.mulf %8, %10 : vector<8x128xf32>
    %12 = tpu.iota {dimensions = array<i32: 0>} : vector<9x128xi32>
    %13 = tpu.iota {dimensions = array<i32: 1>} : vector<9x128xi32>
    %cst_8 = arith.constant 0.000000e+00 : f32
    %14 = vector.broadcast %cst_8 : f32 to vector<8x128xf32>
    %15 = vector.extract_strided_slice %11 {offsets = [0, 0], sizes = [8, 9], strides = [1, 1]} : vector<8x128xf32> to vector<8x9xf32>
    %cst_9 = arith.constant dense<0xFF800000> : vector<8xf32>
    %16 = vector.multi_reduction <maximumf>, %15, %cst_9 [1] : vector<8x9xf32> to vector<8xf32>
    %17 = vector.shape_cast %16 : vector<8xf32> to vector<8x1xf32>
    %18 = vector.broadcast %17 : vector<8x1xf32> to vector<8x9xf32>
    %19 = arith.subf %15, %18 : vector<8x9xf32>
    %20 = math.exp %19 : vector<8x9xf32>
    %cst_10 = arith.constant dense<0.000000e+00> : vector<8xf32>
    %21 = vector.multi_reduction <add>, %20, %cst_10 [1] : vector<8x9xf32> to vector<8xf32>
    %22 = vector.shape_cast %21 : vector<8xf32> to vector<8x1xf32>
    %23 = tpu.reciprocal %22 {approx = true} : vector<8x1xf32> -> vector<8x1xf32>
    %24 = vector.broadcast %23 : vector<8x1xf32> to vector<8x9xf32>
    %25 = arith.mulf %20, %24 : vector<8x9xf32>
    %cst_11 = arith.constant 0.000000e+00 : f32
    %26 = vector.broadcast %cst_11 : f32 to vector<8x9xf32>
    %27 = vector.extract_strided_slice %25 {offsets = [0, 0], sizes = [8, 1], strides = [1, 1]} : vector<8x9xf32> to vector<8x1xf32>
    %28 = vector.extract_strided_slice %0 {offsets = [0, 0], sizes = [8, 9], strides = [1, 1]} : vector<8x768xf32> to vector<8x9xf32>
    %29 = vector.broadcast %27 : vector<8x1xf32> to vector<8x9xf32>
    %30 = arith.mulf %29, %28 : vector<8x9xf32>
    %31 = arith.addf %26, %30 : vector<8x9xf32>
    %32 = vector.extract_strided_slice %25 {offsets = [0, 1], sizes = [8, 1], strides = [1, 1]} : vector<8x9xf32> to vector<8x1xf32>
    %33 = vector.extract_strided_slice %0 {offsets = [0, 9], sizes = [8, 9], strides = [1, 1]} : vector<8x768xf32> to vector<8x9xf32>
    %34 = vector.broadcast %32 : vector<8x1xf32> to vector<8x9xf32>
    %35 = arith.mulf %34, %33 : vector<8x9xf32>
    %36 = arith.addf %31, %35 : vector<8x9xf32>
    %37 = vector.extract_strided_slice %25 {offsets = [0, 2], sizes = [8, 1], strides = [1, 1]} : vector<8x9xf32> to vector<8x1xf32>
    %38 = vector.extract_strided_slice %0 {offsets = [0, 18], sizes = [8, 9], strides = [1, 1]} : vector<8x768xf32> to vector<8x9xf32>
    %39 = vector.broadcast %37 : vector<8x1xf32> to vector<8x9xf32>
    %40 = arith.mulf %39, %38 : vector<8x9xf32>
    %41 = arith.addf %36, %40 : vector<8x9xf32>
    %42 = vector.extract_strided_slice %25 {offsets = [0, 3], sizes = [8, 1], strides = [1, 1]} : vector<8x9xf32> to vector<8x1xf32>
    %43 = vector.extract_strided_slice %0 {offsets = [0, 27], sizes = [8, 9], strides = [1, 1]} : vector<8x768xf32> to vector<8x9xf32>
    %44 = vector.broadcast %42 : vector<8x1xf32> to vector<8x9xf32>
    %45 = arith.mulf %44, %43 : vector<8x9xf32>
    %46 = arith.addf %41, %45 : vector<8x9xf32>
    %47 = vector.extract_strided_slice %25 {offsets = [0, 4], sizes = [8, 1], strides = [1, 1]} : vector<8x9xf32> to vector<8x1xf32>
    %48 = vector.extract_strided_slice %0 {offsets = [0, 36], sizes = [8, 9], strides = [1, 1]} : vector<8x768xf32> to vector<8x9xf32>
    %49 = vector.broadcast %47 : vector<8x1xf32> to vector<8x9xf32>
    %50 = arith.mulf %49, %48 : vector<8x9xf32>
    %51 = arith.addf %46, %50 : vector<8x9xf32>
    %52 = vector.extract_strided_slice %25 {offsets = [0, 5], sizes = [8, 1], strides = [1, 1]} : vector<8x9xf32> to vector<8x1xf32>
    %53 = vector.extract_strided_slice %0 {offsets = [0, 45], sizes = [8, 9], strides = [1, 1]} : vector<8x768xf32> to vector<8x9xf32>
    %54 = vector.broadcast %52 : vector<8x1xf32> to vector<8x9xf32>
    %55 = arith.mulf %54, %53 : vector<8x9xf32>
    %56 = arith.addf %51, %55 : vector<8x9xf32>
    %57 = vector.extract_strided_slice %25 {offsets = [0, 6], sizes = [8, 1], strides = [1, 1]} : vector<8x9xf32> to vector<8x1xf32>
    %58 = vector.extract_strided_slice %0 {offsets = [0, 54], sizes = [8, 9], strides = [1, 1]} : vector<8x768xf32> to vector<8x9xf32>
    %59 = vector.broadcast %57 : vector<8x1xf32> to vector<8x9xf32>
    %60 = arith.mulf %59, %58 : vector<8x9xf32>
    %61 = arith.addf %56, %60 : vector<8x9xf32>
    %62 = vector.extract_strided_slice %25 {offsets = [0, 7], sizes = [8, 1], strides = [1, 1]} : vector<8x9xf32> to vector<8x1xf32>
    %63 = vector.extract_strided_slice %0 {offsets = [0, 63], sizes = [8, 9], strides = [1, 1]} : vector<8x768xf32> to vector<8x9xf32>
    %64 = vector.broadcast %62 : vector<8x1xf32> to vector<8x9xf32>
    %65 = arith.mulf %64, %63 : vector<8x9xf32>
    %66 = arith.addf %61, %65 : vector<8x9xf32>
    %67 = vector.extract_strided_slice %25 {offsets = [0, 8], sizes = [8, 1], strides = [1, 1]} : vector<8x9xf32> to vector<8x1xf32>
    %68 = vector.extract_strided_slice %0 {offsets = [0, 72], sizes = [8, 9], strides = [1, 1]} : vector<8x768xf32> to vector<8x9xf32>
    %69 = vector.broadcast %67 : vector<8x1xf32> to vector<8x9xf32>
    %70 = arith.mulf %69, %68 : vector<8x9xf32>
    %71 = arith.addf %66, %70 : vector<8x9xf32>
    %c0_i32 = arith.constant 0 : i32
    %72 = vector.broadcast %c0_i32 : i32 to vector<9x128xi32>
    %73 = arith.addi %72, %12 : vector<9x128xi32>
    %74 = arith.cmpi eq, %13, %73 : vector<9x128xi32>
    %75 = arith.extui %74 : vector<9x128xi1> to vector<9x128xi32>
    %76 = arith.sitofp %75 : vector<9x128xi32> to vector<9x128xf32>
    %cst_12 = arith.constant dense<0.000000e+00> : vector<8x128xf32>
    %77 = tpu.matmul %71, %76, %cst_12 {dimension_numbers = #tpu.dot_dimension_numbers<[1], [0], [0], [1], [0, 0, 1, 1], [], []>} : vector<8x9xf32>, vector<9x128xf32>, vector<8x128xf32> -> vector<8x128xf32>
    %78 = arith.addf %14, %77 : vector<8x128xf32>
    %79 = vector.extract_strided_slice %11 {offsets = [0, 9], sizes = [8, 9], strides = [1, 1]} : vector<8x128xf32> to vector<8x9xf32>
    %cst_13 = arith.constant dense<0xFF800000> : vector<8xf32>
    %80 = vector.multi_reduction <maximumf>, %79, %cst_13 [1] : vector<8x9xf32> to vector<8xf32>
    %81 = vector.shape_cast %80 : vector<8xf32> to vector<8x1xf32>
    %82 = vector.broadcast %81 : vector<8x1xf32> to vector<8x9xf32>
    %83 = arith.subf %79, %82 : vector<8x9xf32>
    %84 = math.exp %83 : vector<8x9xf32>
    %cst_14 = arith.constant dense<0.000000e+00> : vector<8xf32>
    %85 = vector.multi_reduction <add>, %84, %cst_14 [1] : vector<8x9xf32> to vector<8xf32>
    %86 = vector.shape_cast %85 : vector<8xf32> to vector<8x1xf32>
    %87 = tpu.reciprocal %86 {approx = true} : vector<8x1xf32> -> vector<8x1xf32>
    %88 = vector.broadcast %87 : vector<8x1xf32> to vector<8x9xf32>
    %89 = arith.mulf %84, %88 : vector<8x9xf32>
    %cst_15 = arith.constant 0.000000e+00 : f32
    %90 = vector.broadcast %cst_15 : f32 to vector<8x9xf32>
    %91 = vector.extract_strided_slice %89 {offsets = [0, 0], sizes = [8, 1], strides = [1, 1]} : vector<8x9xf32> to vector<8x1xf32>
    %92 = vector.extract_strided_slice %0 {offsets = [0, 81], sizes = [8, 9], strides = [1, 1]} : vector<8x768xf32> to vector<8x9xf32>
    %93 = vector.broadcast %91 : vector<8x1xf32> to vector<8x9xf32>
    %94 = arith.mulf %93, %92 : vector<8x9xf32>
    %95 = arith.addf %90, %94 : vector<8x9xf32>
    %96 = vector.extract_strided_slice %89 {offsets = [0, 1], sizes = [8, 1], strides = [1, 1]} : vector<8x9xf32> to vector<8x1xf32>
    %97 = vector.extract_strided_slice %0 {offsets = [0, 90], sizes = [8, 9], strides = [1, 1]} : vector<8x768xf32> to vector<8x9xf32>
    %98 = vector.broadcast %96 : vector<8x1xf32> to vector<8x9xf32>
    %99 = arith.mulf %98, %97 : vector<8x9xf32>
    %100 = arith.addf %95, %99 : vector<8x9xf32>
    %101 = vector.extract_strided_slice %89 {offsets = [0, 2], sizes = [8, 1], strides = [1, 1]} : vector<8x9xf32> to vector<8x1xf32>
    %102 = vector.extract_strided_slice %0 {offsets = [0, 99], sizes = [8, 9], strides = [1, 1]} : vector<8x768xf32> to vector<8x9xf32>
    %103 = vector.broadcast %101 : vector<8x1xf32> to vector<8x9xf32>
    %104 = arith.mulf %103, %102 : vector<8x9xf32>
    %105 = arith.addf %100, %104 : vector<8x9xf32>
    %106 = vector.extract_strided_slice %89 {offsets = [0, 3], sizes = [8, 1], strides = [1, 1]} : vector<8x9xf32> to vector<8x1xf32>
    %107 = vector.extract_strided_slice %0 {offsets = [0, 108], sizes = [8, 9], strides = [1, 1]} : vector<8x768xf32> to vector<8x9xf32>
    %108 = vector.broadcast %106 : vector<8x1xf32> to vector<8x9xf32>
    %109 = arith.mulf %108, %107 : vector<8x9xf32>
    %110 = arith.addf %105, %109 : vector<8x9xf32>
    %111 = vector.extract_strided_slice %89 {offsets = [0, 4], sizes = [8, 1], strides = [1, 1]} : vector<8x9xf32> to vector<8x1xf32>
    %112 = vector.extract_strided_slice %0 {offsets = [0, 117], sizes = [8, 9], strides = [1, 1]} : vector<8x768xf32> to vector<8x9xf32>
    %113 = vector.broadcast %111 : vector<8x1xf32> to vector<8x9xf32>
    %114 = arith.mulf %113, %112 : vector<8x9xf32>
    %115 = arith.addf %110, %114 : vector<8x9xf32>
    %116 = vector.extract_strided_slice %89 {offsets = [0, 5], sizes = [8, 1], strides = [1, 1]} : vector<8x9xf32> to vector<8x1xf32>
    %117 = vector.extract_strided_slice %0 {offsets = [0, 126], sizes = [8, 9], strides = [1, 1]} : vector<8x768xf32> to vector<8x9xf32>
    %118 = vector.broadcast %116 : vector<8x1xf32> to vector<8x9xf32>
    %119 = arith.mulf %118, %117 : vector<8x9xf32>
    %120 = arith.addf %115, %119 : vector<8x9xf32>
    %121 = vector.extract_strided_slice %89 {offsets = [0, 6], sizes = [8, 1], strides = [1, 1]} : vector<8x9xf32> to vector<8x1xf32>
    %122 = vector.extract_strided_slice %0 {offsets = [0, 135], sizes = [8, 9], strides = [1, 1]} : vector<8x768xf32> to vector<8x9xf32>
    %123 = vector.broadcast %121 : vector<8x1xf32> to vector<8x9xf32>
    %124 = arith.mulf %123, %122 : vector<8x9xf32>
    %125 = arith.addf %120, %124 : vector<8x9xf32>
    %126 = vector.extract_strided_slice %89 {offsets = [0, 7], sizes = [8, 1], strides = [1, 1]} : vector<8x9xf32> to vector<8x1xf32>
    %127 = vector.extract_strided_slice %0 {offsets = [0, 144], sizes = [8, 9], strides = [1, 1]} : vector<8x768xf32> to vector<8x9xf32>
    %128 = vector.broadcast %126 : vector<8x1xf32> to vector<8x9xf32>
    %129 = arith.mulf %128, %127 : vector<8x9xf32>
    %130 = arith.addf %125, %129 : vector<8x9xf32>
    %131 = vector.extract_strided_slice %89 {offsets = [0, 8], sizes = [8, 1], strides = [1, 1]} : vector<8x9xf32> to vector<8x1xf32>
    %132 = vector.extract_strided_slice %0 {offsets = [0, 153], sizes = [8, 9], strides = [1, 1]} : vector<8x768xf32> to vector<8x9xf32>
    %133 = vector.broadcast %131 : vector<8x1xf32> to vector<8x9xf32>
    %134 = arith.mulf %133, %132 : vector<8x9xf32>
    %135 = arith.addf %130, %134 : vector<8x9xf32>
    %c9_i32 = arith.constant 9 : i32
    %136 = vector.broadcast %c9_i32 : i32 to vector<9x128xi32>
    %137 = arith.addi %136, %12 : vector<9x128xi32>
    %138 = arith.cmpi eq, %13, %137 : vector<9x128xi32>
    %139 = arith.extui %138 : vector<9x128xi1> to vector<9x128xi32>
    %140 = arith.sitofp %139 : vector<9x128xi32> to vector<9x128xf32>
    %cst_16 = arith.constant dense<0.000000e+00> : vector<8x128xf32>
    %141 = tpu.matmul %135, %140, %cst_16 {dimension_numbers = #tpu.dot_dimension_numbers<[1], [0], [0], [1], [0, 0, 1, 1], [], []>} : vector<8x9xf32>, vector<9x128xf32>, vector<8x128xf32> -> vector<8x128xf32>
    %142 = arith.addf %78, %141 : vector<8x128xf32>
    %143 = vector.extract_strided_slice %11 {offsets = [0, 18], sizes = [8, 9], strides = [1, 1]} : vector<8x128xf32> to vector<8x9xf32>
    %cst_17 = arith.constant dense<0xFF800000> : vector<8xf32>
    %144 = vector.multi_reduction <maximumf>, %143, %cst_17 [1] : vector<8x9xf32> to vector<8xf32>
    %145 = vector.shape_cast %144 : vector<8xf32> to vector<8x1xf32>
    %146 = vector.broadcast %145 : vector<8x1xf32> to vector<8x9xf32>
    %147 = arith.subf %143, %146 : vector<8x9xf32>
    %148 = math.exp %147 : vector<8x9xf32>
    %cst_18 = arith.constant dense<0.000000e+00> : vector<8xf32>
    %149 = vector.multi_reduction <add>, %148, %cst_18 [1] : vector<8x9xf32> to vector<8xf32>
    %150 = vector.shape_cast %149 : vector<8xf32> to vector<8x1xf32>
    %151 = tpu.reciprocal %150 {approx = true} : vector<8x1xf32> -> vector<8x1xf32>
    %152 = vector.broadcast %151 : vector<8x1xf32> to vector<8x9xf32>
    %153 = arith.mulf %148, %152 : vector<8x9xf32>
    %cst_19 = arith.constant 0.000000e+00 : f32
    %154 = vector.broadcast %cst_19 : f32 to vector<8x9xf32>
    %155 = vector.extract_strided_slice %153 {offsets = [0, 0], sizes = [8, 1], strides = [1, 1]} : vector<8x9xf32> to vector<8x1xf32>
    %156 = vector.extract_strided_slice %0 {offsets = [0, 162], sizes = [8, 9], strides = [1, 1]} : vector<8x768xf32> to vector<8x9xf32>
    %157 = vector.broadcast %155 : vector<8x1xf32> to vector<8x9xf32>
    %158 = arith.mulf %157, %156 : vector<8x9xf32>
    %159 = arith.addf %154, %158 : vector<8x9xf32>
    %160 = vector.extract_strided_slice %153 {offsets = [0, 1], sizes = [8, 1], strides = [1, 1]} : vector<8x9xf32> to vector<8x1xf32>
    %161 = vector.extract_strided_slice %0 {offsets = [0, 171], sizes = [8, 9], strides = [1, 1]} : vector<8x768xf32> to vector<8x9xf32>
    %162 = vector.broadcast %160 : vector<8x1xf32> to vector<8x9xf32>
    %163 = arith.mulf %162, %161 : vector<8x9xf32>
    %164 = arith.addf %159, %163 : vector<8x9xf32>
    %165 = vector.extract_strided_slice %153 {offsets = [0, 2], sizes = [8, 1], strides = [1, 1]} : vector<8x9xf32> to vector<8x1xf32>
    %166 = vector.extract_strided_slice %0 {offsets = [0, 180], sizes = [8, 9], strides = [1, 1]} : vector<8x768xf32> to vector<8x9xf32>
    %167 = vector.broadcast %165 : vector<8x1xf32> to vector<8x9xf32>
    %168 = arith.mulf %167, %166 : vector<8x9xf32>
    %169 = arith.addf %164, %168 : vector<8x9xf32>
    %170 = vector.extract_strided_slice %153 {offsets = [0, 3], sizes = [8, 1], strides = [1, 1]} : vector<8x9xf32> to vector<8x1xf32>
    %171 = vector.extract_strided_slice %0 {offsets = [0, 189], sizes = [8, 9], strides = [1, 1]} : vector<8x768xf32> to vector<8x9xf32>
    %172 = vector.broadcast %170 : vector<8x1xf32> to vector<8x9xf32>
    %173 = arith.mulf %172, %171 : vector<8x9xf32>
    %174 = arith.addf %169, %173 : vector<8x9xf32>
    %175 = vector.extract_strided_slice %153 {offsets = [0, 4], sizes = [8, 1], strides = [1, 1]} : vector<8x9xf32> to vector<8x1xf32>
    %176 = vector.extract_strided_slice %0 {offsets = [0, 198], sizes = [8, 9], strides = [1, 1]} : vector<8x768xf32> to vector<8x9xf32>
    %177 = vector.broadcast %175 : vector<8x1xf32> to vector<8x9xf32>
    %178 = arith.mulf %177, %176 : vector<8x9xf32>
    %179 = arith.addf %174, %178 : vector<8x9xf32>
    %180 = vector.extract_strided_slice %153 {offsets = [0, 5], sizes = [8, 1], strides = [1, 1]} : vector<8x9xf32> to vector<8x1xf32>
    %181 = vector.extract_strided_slice %0 {offsets = [0, 207], sizes = [8, 9], strides = [1, 1]} : vector<8x768xf32> to vector<8x9xf32>
    %182 = vector.broadcast %180 : vector<8x1xf32> to vector<8x9xf32>
    %183 = arith.mulf %182, %181 : vector<8x9xf32>
    %184 = arith.addf %179, %183 : vector<8x9xf32>
    %185 = vector.extract_strided_slice %153 {offsets = [0, 6], sizes = [8, 1], strides = [1, 1]} : vector<8x9xf32> to vector<8x1xf32>
    %186 = vector.extract_strided_slice %0 {offsets = [0, 216], sizes = [8, 9], strides = [1, 1]} : vector<8x768xf32> to vector<8x9xf32>
    %187 = vector.broadcast %185 : vector<8x1xf32> to vector<8x9xf32>
    %188 = arith.mulf %187, %186 : vector<8x9xf32>
    %189 = arith.addf %184, %188 : vector<8x9xf32>
    %190 = vector.extract_strided_slice %153 {offsets = [0, 7], sizes = [8, 1], strides = [1, 1]} : vector<8x9xf32> to vector<8x1xf32>
    %191 = vector.extract_strided_slice %0 {offsets = [0, 225], sizes = [8, 9], strides = [1, 1]} : vector<8x768xf32> to vector<8x9xf32>
    %192 = vector.broadcast %190 : vector<8x1xf32> to vector<8x9xf32>
    %193 = arith.mulf %192, %191 : vector<8x9xf32>
    %194 = arith.addf %189, %193 : vector<8x9xf32>
    %195 = vector.extract_strided_slice %153 {offsets = [0, 8], sizes = [8, 1], strides = [1, 1]} : vector<8x9xf32> to vector<8x1xf32>
    %196 = vector.extract_strided_slice %0 {offsets = [0, 234], sizes = [8, 9], strides = [1, 1]} : vector<8x768xf32> to vector<8x9xf32>
    %197 = vector.broadcast %195 : vector<8x1xf32> to vector<8x9xf32>
    %198 = arith.mulf %197, %196 : vector<8x9xf32>
    %199 = arith.addf %194, %198 : vector<8x9xf32>
    %c18_i32 = arith.constant 18 : i32
    %200 = vector.broadcast %c18_i32 : i32 to vector<9x128xi32>
    %201 = arith.addi %200, %12 : vector<9x128xi32>
    %202 = arith.cmpi eq, %13, %201 : vector<9x128xi32>
    %203 = arith.extui %202 : vector<9x128xi1> to vector<9x128xi32>
    %204 = arith.sitofp %203 : vector<9x128xi32> to vector<9x128xf32>
    %cst_20 = arith.constant dense<0.000000e+00> : vector<8x128xf32>
    %205 = tpu.matmul %199, %204, %cst_20 {dimension_numbers = #tpu.dot_dimension_numbers<[1], [0], [0], [1], [0, 0, 1, 1], [], []>} : vector<8x9xf32>, vector<9x128xf32>, vector<8x128xf32> -> vector<8x128xf32>
    %206 = arith.addf %142, %205 : vector<8x128xf32>
    %207 = vector.extract_strided_slice %11 {offsets = [0, 27], sizes = [8, 9], strides = [1, 1]} : vector<8x128xf32> to vector<8x9xf32>
    %cst_21 = arith.constant dense<0xFF800000> : vector<8xf32>
    %208 = vector.multi_reduction <maximumf>, %207, %cst_21 [1] : vector<8x9xf32> to vector<8xf32>
    %209 = vector.shape_cast %208 : vector<8xf32> to vector<8x1xf32>
    %210 = vector.broadcast %209 : vector<8x1xf32> to vector<8x9xf32>
    %211 = arith.subf %207, %210 : vector<8x9xf32>
    %212 = math.exp %211 : vector<8x9xf32>
    %cst_22 = arith.constant dense<0.000000e+00> : vector<8xf32>
    %213 = vector.multi_reduction <add>, %212, %cst_22 [1] : vector<8x9xf32> to vector<8xf32>
    %214 = vector.shape_cast %213 : vector<8xf32> to vector<8x1xf32>
    %215 = tpu.reciprocal %214 {approx = true} : vector<8x1xf32> -> vector<8x1xf32>
    %216 = vector.broadcast %215 : vector<8x1xf32> to vector<8x9xf32>
    %217 = arith.mulf %212, %216 : vector<8x9xf32>
    %cst_23 = arith.constant 0.000000e+00 : f32
    %218 = vector.broadcast %cst_23 : f32 to vector<8x9xf32>
    %219 = vector.extract_strided_slice %217 {offsets = [0, 0], sizes = [8, 1], strides = [1, 1]} : vector<8x9xf32> to vector<8x1xf32>
    %220 = vector.extract_strided_slice %0 {offsets = [0, 243], sizes = [8, 9], strides = [1, 1]} : vector<8x768xf32> to vector<8x9xf32>
    %221 = vector.broadcast %219 : vector<8x1xf32> to vector<8x9xf32>
    %222 = arith.mulf %221, %220 : vector<8x9xf32>
    %223 = arith.addf %218, %222 : vector<8x9xf32>
    %224 = vector.extract_strided_slice %217 {offsets = [0, 1], sizes = [8, 1], strides = [1, 1]} : vector<8x9xf32> to vector<8x1xf32>
    %225 = vector.extract_strided_slice %0 {offsets = [0, 252], sizes = [8, 9], strides = [1, 1]} : vector<8x768xf32> to vector<8x9xf32>
    %226 = vector.broadcast %224 : vector<8x1xf32> to vector<8x9xf32>
    %227 = arith.mulf %226, %225 : vector<8x9xf32>
    %228 = arith.addf %223, %227 : vector<8x9xf32>
    %229 = vector.extract_strided_slice %217 {offsets = [0, 2], sizes = [8, 1], strides = [1, 1]} : vector<8x9xf32> to vector<8x1xf32>
    %230 = vector.extract_strided_slice %0 {offsets = [0, 261], sizes = [8, 9], strides = [1, 1]} : vector<8x768xf32> to vector<8x9xf32>
    %231 = vector.broadcast %229 : vector<8x1xf32> to vector<8x9xf32>
    %232 = arith.mulf %231, %230 : vector<8x9xf32>
    %233 = arith.addf %228, %232 : vector<8x9xf32>
    %234 = vector.extract_strided_slice %217 {offsets = [0, 3], sizes = [8, 1], strides = [1, 1]} : vector<8x9xf32> to vector<8x1xf32>
    %235 = vector.extract_strided_slice %0 {offsets = [0, 270], sizes = [8, 9], strides = [1, 1]} : vector<8x768xf32> to vector<8x9xf32>
    %236 = vector.broadcast %234 : vector<8x1xf32> to vector<8x9xf32>
    %237 = arith.mulf %236, %235 : vector<8x9xf32>
    %238 = arith.addf %233, %237 : vector<8x9xf32>
    %239 = vector.extract_strided_slice %217 {offsets = [0, 4], sizes = [8, 1], strides = [1, 1]} : vector<8x9xf32> to vector<8x1xf32>
    %240 = vector.extract_strided_slice %0 {offsets = [0, 279], sizes = [8, 9], strides = [1, 1]} : vector<8x768xf32> to vector<8x9xf32>
    %241 = vector.broadcast %239 : vector<8x1xf32> to vector<8x9xf32>
    %242 = arith.mulf %241, %240 : vector<8x9xf32>
    %243 = arith.addf %238, %242 : vector<8x9xf32>
    %244 = vector.extract_strided_slice %217 {offsets = [0, 5], sizes = [8, 1], strides = [1, 1]} : vector<8x9xf32> to vector<8x1xf32>
    %245 = vector.extract_strided_slice %0 {offsets = [0, 288], sizes = [8, 9], strides = [1, 1]} : vector<8x768xf32> to vector<8x9xf32>
    %246 = vector.broadcast %244 : vector<8x1xf32> to vector<8x9xf32>
    %247 = arith.mulf %246, %245 : vector<8x9xf32>
    %248 = arith.addf %243, %247 : vector<8x9xf32>
    %249 = vector.extract_strided_slice %217 {offsets = [0, 6], sizes = [8, 1], strides = [1, 1]} : vector<8x9xf32> to vector<8x1xf32>
    %250 = vector.extract_strided_slice %0 {offsets = [0, 297], sizes = [8, 9], strides = [1, 1]} : vector<8x768xf32> to vector<8x9xf32>
    %251 = vector.broadcast %249 : vector<8x1xf32> to vector<8x9xf32>
    %252 = arith.mulf %251, %250 : vector<8x9xf32>
    %253 = arith.addf %248, %252 : vector<8x9xf32>
    %254 = vector.extract_strided_slice %217 {offsets = [0, 7], sizes = [8, 1], strides = [1, 1]} : vector<8x9xf32> to vector<8x1xf32>
    %255 = vector.extract_strided_slice %0 {offsets = [0, 306], sizes = [8, 9], strides = [1, 1]} : vector<8x768xf32> to vector<8x9xf32>
    %256 = vector.broadcast %254 : vector<8x1xf32> to vector<8x9xf32>
    %257 = arith.mulf %256, %255 : vector<8x9xf32>
    %258 = arith.addf %253, %257 : vector<8x9xf32>
    %259 = vector.extract_strided_slice %217 {offsets = [0, 8], sizes = [8, 1], strides = [1, 1]} : vector<8x9xf32> to vector<8x1xf32>
    %260 = vector.extract_strided_slice %0 {offsets = [0, 315], sizes = [8, 9], strides = [1, 1]} : vector<8x768xf32> to vector<8x9xf32>
    %261 = vector.broadcast %259 : vector<8x1xf32> to vector<8x9xf32>
    %262 = arith.mulf %261, %260 : vector<8x9xf32>
    %263 = arith.addf %258, %262 : vector<8x9xf32>
    %c27_i32 = arith.constant 27 : i32
    %264 = vector.broadcast %c27_i32 : i32 to vector<9x128xi32>
    %265 = arith.addi %264, %12 : vector<9x128xi32>
    %266 = arith.cmpi eq, %13, %265 : vector<9x128xi32>
    %267 = arith.extui %266 : vector<9x128xi1> to vector<9x128xi32>
    %268 = arith.sitofp %267 : vector<9x128xi32> to vector<9x128xf32>
    %cst_24 = arith.constant dense<0.000000e+00> : vector<8x128xf32>
    %269 = tpu.matmul %263, %268, %cst_24 {dimension_numbers = #tpu.dot_dimension_numbers<[1], [0], [0], [1], [0, 0, 1, 1], [], []>} : vector<8x9xf32>, vector<9x128xf32>, vector<8x128xf32> -> vector<8x128xf32>
    %270 = arith.addf %206, %269 : vector<8x128xf32>
    %271 = vector.extract_strided_slice %11 {offsets = [0, 36], sizes = [8, 9], strides = [1, 1]} : vector<8x128xf32> to vector<8x9xf32>
    %cst_25 = arith.constant dense<0xFF800000> : vector<8xf32>
    %272 = vector.multi_reduction <maximumf>, %271, %cst_25 [1] : vector<8x9xf32> to vector<8xf32>
    %273 = vector.shape_cast %272 : vector<8xf32> to vector<8x1xf32>
    %274 = vector.broadcast %273 : vector<8x1xf32> to vector<8x9xf32>
    %275 = arith.subf %271, %274 : vector<8x9xf32>
    %276 = math.exp %275 : vector<8x9xf32>
    %cst_26 = arith.constant dense<0.000000e+00> : vector<8xf32>
    %277 = vector.multi_reduction <add>, %276, %cst_26 [1] : vector<8x9xf32> to vector<8xf32>
    %278 = vector.shape_cast %277 : vector<8xf32> to vector<8x1xf32>
    %279 = tpu.reciprocal %278 {approx = true} : vector<8x1xf32> -> vector<8x1xf32>
    %280 = vector.broadcast %279 : vector<8x1xf32> to vector<8x9xf32>
    %281 = arith.mulf %276, %280 : vector<8x9xf32>
    %cst_27 = arith.constant 0.000000e+00 : f32
    %282 = vector.broadcast %cst_27 : f32 to vector<8x9xf32>
    %283 = vector.extract_strided_slice %281 {offsets = [0, 0], sizes = [8, 1], strides = [1, 1]} : vector<8x9xf32> to vector<8x1xf32>
    %284 = vector.extract_strided_slice %0 {offsets = [0, 324], sizes = [8, 9], strides = [1, 1]} : vector<8x768xf32> to vector<8x9xf32>
    %285 = vector.broadcast %283 : vector<8x1xf32> to vector<8x9xf32>
    %286 = arith.mulf %285, %284 : vector<8x9xf32>
    %287 = arith.addf %282, %286 : vector<8x9xf32>
    %288 = vector.extract_strided_slice %281 {offsets = [0, 1], sizes = [8, 1], strides = [1, 1]} : vector<8x9xf32> to vector<8x1xf32>
    %289 = vector.extract_strided_slice %0 {offsets = [0, 333], sizes = [8, 9], strides = [1, 1]} : vector<8x768xf32> to vector<8x9xf32>
    %290 = vector.broadcast %288 : vector<8x1xf32> to vector<8x9xf32>
    %291 = arith.mulf %290, %289 : vector<8x9xf32>
    %292 = arith.addf %287, %291 : vector<8x9xf32>
    %293 = vector.extract_strided_slice %281 {offsets = [0, 2], sizes = [8, 1], strides = [1, 1]} : vector<8x9xf32> to vector<8x1xf32>
    %294 = vector.extract_strided_slice %0 {offsets = [0, 342], sizes = [8, 9], strides = [1, 1]} : vector<8x768xf32> to vector<8x9xf32>
    %295 = vector.broadcast %293 : vector<8x1xf32> to vector<8x9xf32>
    %296 = arith.mulf %295, %294 : vector<8x9xf32>
    %297 = arith.addf %292, %296 : vector<8x9xf32>
    %298 = vector.extract_strided_slice %281 {offsets = [0, 3], sizes = [8, 1], strides = [1, 1]} : vector<8x9xf32> to vector<8x1xf32>
    %299 = vector.extract_strided_slice %0 {offsets = [0, 351], sizes = [8, 9], strides = [1, 1]} : vector<8x768xf32> to vector<8x9xf32>
    %300 = vector.broadcast %298 : vector<8x1xf32> to vector<8x9xf32>
    %301 = arith.mulf %300, %299 : vector<8x9xf32>
    %302 = arith.addf %297, %301 : vector<8x9xf32>
    %303 = vector.extract_strided_slice %281 {offsets = [0, 4], sizes = [8, 1], strides = [1, 1]} : vector<8x9xf32> to vector<8x1xf32>
    %304 = vector.extract_strided_slice %0 {offsets = [0, 360], sizes = [8, 9], strides = [1, 1]} : vector<8x768xf32> to vector<8x9xf32>
    %305 = vector.broadcast %303 : vector<8x1xf32> to vector<8x9xf32>
    %306 = arith.mulf %305, %304 : vector<8x9xf32>
    %307 = arith.addf %302, %306 : vector<8x9xf32>
    %308 = vector.extract_strided_slice %281 {offsets = [0, 5], sizes = [8, 1], strides = [1, 1]} : vector<8x9xf32> to vector<8x1xf32>
    %309 = vector.extract_strided_slice %0 {offsets = [0, 369], sizes = [8, 9], strides = [1, 1]} : vector<8x768xf32> to vector<8x9xf32>
    %310 = vector.broadcast %308 : vector<8x1xf32> to vector<8x9xf32>
    %311 = arith.mulf %310, %309 : vector<8x9xf32>
    %312 = arith.addf %307, %311 : vector<8x9xf32>
    %313 = vector.extract_strided_slice %281 {offsets = [0, 6], sizes = [8, 1], strides = [1, 1]} : vector<8x9xf32> to vector<8x1xf32>
    %314 = vector.extract_strided_slice %0 {offsets = [0, 378], sizes = [8, 9], strides = [1, 1]} : vector<8x768xf32> to vector<8x9xf32>
    %315 = vector.broadcast %313 : vector<8x1xf32> to vector<8x9xf32>
    %316 = arith.mulf %315, %314 : vector<8x9xf32>
    %317 = arith.addf %312, %316 : vector<8x9xf32>
    %318 = vector.extract_strided_slice %281 {offsets = [0, 7], sizes = [8, 1], strides = [1, 1]} : vector<8x9xf32> to vector<8x1xf32>
    %319 = vector.extract_strided_slice %0 {offsets = [0, 387], sizes = [8, 9], strides = [1, 1]} : vector<8x768xf32> to vector<8x9xf32>
    %320 = vector.broadcast %318 : vector<8x1xf32> to vector<8x9xf32>
    %321 = arith.mulf %320, %319 : vector<8x9xf32>
    %322 = arith.addf %317, %321 : vector<8x9xf32>
    %323 = vector.extract_strided_slice %281 {offsets = [0, 8], sizes = [8, 1], strides = [1, 1]} : vector<8x9xf32> to vector<8x1xf32>
    %324 = vector.extract_strided_slice %0 {offsets = [0, 396], sizes = [8, 9], strides = [1, 1]} : vector<8x768xf32> to vector<8x9xf32>
    %325 = vector.broadcast %323 : vector<8x1xf32> to vector<8x9xf32>
    %326 = arith.mulf %325, %324 : vector<8x9xf32>
    %327 = arith.addf %322, %326 : vector<8x9xf32>
    %c36_i32 = arith.constant 36 : i32
    %328 = vector.broadcast %c36_i32 : i32 to vector<9x128xi32>
    %329 = arith.addi %328, %12 : vector<9x128xi32>
    %330 = arith.cmpi eq, %13, %329 : vector<9x128xi32>
    %331 = arith.extui %330 : vector<9x128xi1> to vector<9x128xi32>
    %332 = arith.sitofp %331 : vector<9x128xi32> to vector<9x128xf32>
    %cst_28 = arith.constant dense<0.000000e+00> : vector<8x128xf32>
    %333 = tpu.matmul %327, %332, %cst_28 {dimension_numbers = #tpu.dot_dimension_numbers<[1], [0], [0], [1], [0, 0, 1, 1], [], []>} : vector<8x9xf32>, vector<9x128xf32>, vector<8x128xf32> -> vector<8x128xf32>
    %334 = arith.addf %270, %333 : vector<8x128xf32>
    %335 = vector.extract_strided_slice %11 {offsets = [0, 45], sizes = [8, 9], strides = [1, 1]} : vector<8x128xf32> to vector<8x9xf32>
    %cst_29 = arith.constant dense<0xFF800000> : vector<8xf32>
    %336 = vector.multi_reduction <maximumf>, %335, %cst_29 [1] : vector<8x9xf32> to vector<8xf32>
    %337 = vector.shape_cast %336 : vector<8xf32> to vector<8x1xf32>
    %338 = vector.broadcast %337 : vector<8x1xf32> to vector<8x9xf32>
    %339 = arith.subf %335, %338 : vector<8x9xf32>
    %340 = math.exp %339 : vector<8x9xf32>
    %cst_30 = arith.constant dense<0.000000e+00> : vector<8xf32>
    %341 = vector.multi_reduction <add>, %340, %cst_30 [1] : vector<8x9xf32> to vector<8xf32>
    %342 = vector.shape_cast %341 : vector<8xf32> to vector<8x1xf32>
    %343 = tpu.reciprocal %342 {approx = true} : vector<8x1xf32> -> vector<8x1xf32>
    %344 = vector.broadcast %343 : vector<8x1xf32> to vector<8x9xf32>
    %345 = arith.mulf %340, %344 : vector<8x9xf32>
    %cst_31 = arith.constant 0.000000e+00 : f32
    %346 = vector.broadcast %cst_31 : f32 to vector<8x9xf32>
    %347 = vector.extract_strided_slice %345 {offsets = [0, 0], sizes = [8, 1], strides = [1, 1]} : vector<8x9xf32> to vector<8x1xf32>
    %348 = vector.extract_strided_slice %0 {offsets = [0, 405], sizes = [8, 9], strides = [1, 1]} : vector<8x768xf32> to vector<8x9xf32>
    %349 = vector.broadcast %347 : vector<8x1xf32> to vector<8x9xf32>
    %350 = arith.mulf %349, %348 : vector<8x9xf32>
    %351 = arith.addf %346, %350 : vector<8x9xf32>
    %352 = vector.extract_strided_slice %345 {offsets = [0, 1], sizes = [8, 1], strides = [1, 1]} : vector<8x9xf32> to vector<8x1xf32>
    %353 = vector.extract_strided_slice %0 {offsets = [0, 414], sizes = [8, 9], strides = [1, 1]} : vector<8x768xf32> to vector<8x9xf32>
    %354 = vector.broadcast %352 : vector<8x1xf32> to vector<8x9xf32>
    %355 = arith.mulf %354, %353 : vector<8x9xf32>
    %356 = arith.addf %351, %355 : vector<8x9xf32>
    %357 = vector.extract_strided_slice %345 {offsets = [0, 2], sizes = [8, 1], strides = [1, 1]} : vector<8x9xf32> to vector<8x1xf32>
    %358 = vector.extract_strided_slice %0 {offsets = [0, 423], sizes = [8, 9], strides = [1, 1]} : vector<8x768xf32> to vector<8x9xf32>
    %359 = vector.broadcast %357 : vector<8x1xf32> to vector<8x9xf32>
    %360 = arith.mulf %359, %358 : vector<8x9xf32>
    %361 = arith.addf %356, %360 : vector<8x9xf32>
    %362 = vector.extract_strided_slice %345 {offsets = [0, 3], sizes = [8, 1], strides = [1, 1]} : vector<8x9xf32> to vector<8x1xf32>
    %363 = vector.extract_strided_slice %0 {offsets = [0, 432], sizes = [8, 9], strides = [1, 1]} : vector<8x768xf32> to vector<8x9xf32>
    %364 = vector.broadcast %362 : vector<8x1xf32> to vector<8x9xf32>
    %365 = arith.mulf %364, %363 : vector<8x9xf32>
    %366 = arith.addf %361, %365 : vector<8x9xf32>
    %367 = vector.extract_strided_slice %345 {offsets = [0, 4], sizes = [8, 1], strides = [1, 1]} : vector<8x9xf32> to vector<8x1xf32>
    %368 = vector.extract_strided_slice %0 {offsets = [0, 441], sizes = [8, 9], strides = [1, 1]} : vector<8x768xf32> to vector<8x9xf32>
    %369 = vector.broadcast %367 : vector<8x1xf32> to vector<8x9xf32>
    %370 = arith.mulf %369, %368 : vector<8x9xf32>
    %371 = arith.addf %366, %370 : vector<8x9xf32>
    %372 = vector.extract_strided_slice %345 {offsets = [0, 5], sizes = [8, 1], strides = [1, 1]} : vector<8x9xf32> to vector<8x1xf32>
    %373 = vector.extract_strided_slice %0 {offsets = [0, 450], sizes = [8, 9], strides = [1, 1]} : vector<8x768xf32> to vector<8x9xf32>
    %374 = vector.broadcast %372 : vector<8x1xf32> to vector<8x9xf32>
    %375 = arith.mulf %374, %373 : vector<8x9xf32>
    %376 = arith.addf %371, %375 : vector<8x9xf32>
    %377 = vector.extract_strided_slice %345 {offsets = [0, 6], sizes = [8, 1], strides = [1, 1]} : vector<8x9xf32> to vector<8x1xf32>
    %378 = vector.extract_strided_slice %0 {offsets = [0, 459], sizes = [8, 9], strides = [1, 1]} : vector<8x768xf32> to vector<8x9xf32>
    %379 = vector.broadcast %377 : vector<8x1xf32> to vector<8x9xf32>
    %380 = arith.mulf %379, %378 : vector<8x9xf32>
    %381 = arith.addf %376, %380 : vector<8x9xf32>
    %382 = vector.extract_strided_slice %345 {offsets = [0, 7], sizes = [8, 1], strides = [1, 1]} : vector<8x9xf32> to vector<8x1xf32>
    %383 = vector.extract_strided_slice %0 {offsets = [0, 468], sizes = [8, 9], strides = [1, 1]} : vector<8x768xf32> to vector<8x9xf32>
    %384 = vector.broadcast %382 : vector<8x1xf32> to vector<8x9xf32>
    %385 = arith.mulf %384, %383 : vector<8x9xf32>
    %386 = arith.addf %381, %385 : vector<8x9xf32>
    %387 = vector.extract_strided_slice %345 {offsets = [0, 8], sizes = [8, 1], strides = [1, 1]} : vector<8x9xf32> to vector<8x1xf32>
    %388 = vector.extract_strided_slice %0 {offsets = [0, 477], sizes = [8, 9], strides = [1, 1]} : vector<8x768xf32> to vector<8x9xf32>
    %389 = vector.broadcast %387 : vector<8x1xf32> to vector<8x9xf32>
    %390 = arith.mulf %389, %388 : vector<8x9xf32>
    %391 = arith.addf %386, %390 : vector<8x9xf32>
    %c45_i32 = arith.constant 45 : i32
    %392 = vector.broadcast %c45_i32 : i32 to vector<9x128xi32>
    %393 = arith.addi %392, %12 : vector<9x128xi32>
    %394 = arith.cmpi eq, %13, %393 : vector<9x128xi32>
    %395 = arith.extui %394 : vector<9x128xi1> to vector<9x128xi32>
    %396 = arith.sitofp %395 : vector<9x128xi32> to vector<9x128xf32>
    %cst_32 = arith.constant dense<0.000000e+00> : vector<8x128xf32>
    %397 = tpu.matmul %391, %396, %cst_32 {dimension_numbers = #tpu.dot_dimension_numbers<[1], [0], [0], [1], [0, 0, 1, 1], [], []>} : vector<8x9xf32>, vector<9x128xf32>, vector<8x128xf32> -> vector<8x128xf32>
    %398 = arith.addf %334, %397 : vector<8x128xf32>
    %399 = vector.extract_strided_slice %11 {offsets = [0, 54], sizes = [8, 9], strides = [1, 1]} : vector<8x128xf32> to vector<8x9xf32>
    %cst_33 = arith.constant dense<0xFF800000> : vector<8xf32>
    %400 = vector.multi_reduction <maximumf>, %399, %cst_33 [1] : vector<8x9xf32> to vector<8xf32>
    %401 = vector.shape_cast %400 : vector<8xf32> to vector<8x1xf32>
    %402 = vector.broadcast %401 : vector<8x1xf32> to vector<8x9xf32>
    %403 = arith.subf %399, %402 : vector<8x9xf32>
    %404 = math.exp %403 : vector<8x9xf32>
    %cst_34 = arith.constant dense<0.000000e+00> : vector<8xf32>
    %405 = vector.multi_reduction <add>, %404, %cst_34 [1] : vector<8x9xf32> to vector<8xf32>
    %406 = vector.shape_cast %405 : vector<8xf32> to vector<8x1xf32>
    %407 = tpu.reciprocal %406 {approx = true} : vector<8x1xf32> -> vector<8x1xf32>
    %408 = vector.broadcast %407 : vector<8x1xf32> to vector<8x9xf32>
    %409 = arith.mulf %404, %408 : vector<8x9xf32>
    %cst_35 = arith.constant 0.000000e+00 : f32
    %410 = vector.broadcast %cst_35 : f32 to vector<8x9xf32>
    %411 = vector.extract_strided_slice %409 {offsets = [0, 0], sizes = [8, 1], strides = [1, 1]} : vector<8x9xf32> to vector<8x1xf32>
    %412 = vector.extract_strided_slice %0 {offsets = [0, 486], sizes = [8, 9], strides = [1, 1]} : vector<8x768xf32> to vector<8x9xf32>
    %413 = vector.broadcast %411 : vector<8x1xf32> to vector<8x9xf32>
    %414 = arith.mulf %413, %412 : vector<8x9xf32>
    %415 = arith.addf %410, %414 : vector<8x9xf32>
    %416 = vector.extract_strided_slice %409 {offsets = [0, 1], sizes = [8, 1], strides = [1, 1]} : vector<8x9xf32> to vector<8x1xf32>
    %417 = vector.extract_strided_slice %0 {offsets = [0, 495], sizes = [8, 9], strides = [1, 1]} : vector<8x768xf32> to vector<8x9xf32>
    %418 = vector.broadcast %416 : vector<8x1xf32> to vector<8x9xf32>
    %419 = arith.mulf %418, %417 : vector<8x9xf32>
    %420 = arith.addf %415, %419 : vector<8x9xf32>
    %421 = vector.extract_strided_slice %409 {offsets = [0, 2], sizes = [8, 1], strides = [1, 1]} : vector<8x9xf32> to vector<8x1xf32>
    %422 = vector.extract_strided_slice %0 {offsets = [0, 504], sizes = [8, 9], strides = [1, 1]} : vector<8x768xf32> to vector<8x9xf32>
    %423 = vector.broadcast %421 : vector<8x1xf32> to vector<8x9xf32>
    %424 = arith.mulf %423, %422 : vector<8x9xf32>
    %425 = arith.addf %420, %424 : vector<8x9xf32>
    %426 = vector.extract_strided_slice %409 {offsets = [0, 3], sizes = [8, 1], strides = [1, 1]} : vector<8x9xf32> to vector<8x1xf32>
    %427 = vector.extract_strided_slice %0 {offsets = [0, 513], sizes = [8, 9], strides = [1, 1]} : vector<8x768xf32> to vector<8x9xf32>
    %428 = vector.broadcast %426 : vector<8x1xf32> to vector<8x9xf32>
    %429 = arith.mulf %428, %427 : vector<8x9xf32>
    %430 = arith.addf %425, %429 : vector<8x9xf32>
    %431 = vector.extract_strided_slice %409 {offsets = [0, 4], sizes = [8, 1], strides = [1, 1]} : vector<8x9xf32> to vector<8x1xf32>
    %432 = vector.extract_strided_slice %0 {offsets = [0, 522], sizes = [8, 9], strides = [1, 1]} : vector<8x768xf32> to vector<8x9xf32>
    %433 = vector.broadcast %431 : vector<8x1xf32> to vector<8x9xf32>
    %434 = arith.mulf %433, %432 : vector<8x9xf32>
    %435 = arith.addf %430, %434 : vector<8x9xf32>
    %436 = vector.extract_strided_slice %409 {offsets = [0, 5], sizes = [8, 1], strides = [1, 1]} : vector<8x9xf32> to vector<8x1xf32>
    %437 = vector.extract_strided_slice %0 {offsets = [0, 531], sizes = [8, 9], strides = [1, 1]} : vector<8x768xf32> to vector<8x9xf32>
    %438 = vector.broadcast %436 : vector<8x1xf32> to vector<8x9xf32>
    %439 = arith.mulf %438, %437 : vector<8x9xf32>
    %440 = arith.addf %435, %439 : vector<8x9xf32>
    %441 = vector.extract_strided_slice %409 {offsets = [0, 6], sizes = [8, 1], strides = [1, 1]} : vector<8x9xf32> to vector<8x1xf32>
    %442 = vector.extract_strided_slice %0 {offsets = [0, 540], sizes = [8, 9], strides = [1, 1]} : vector<8x768xf32> to vector<8x9xf32>
    %443 = vector.broadcast %441 : vector<8x1xf32> to vector<8x9xf32>
    %444 = arith.mulf %443, %442 : vector<8x9xf32>
    %445 = arith.addf %440, %444 : vector<8x9xf32>
    %446 = vector.extract_strided_slice %409 {offsets = [0, 7], sizes = [8, 1], strides = [1, 1]} : vector<8x9xf32> to vector<8x1xf32>
    %447 = vector.extract_strided_slice %0 {offsets = [0, 549], sizes = [8, 9], strides = [1, 1]} : vector<8x768xf32> to vector<8x9xf32>
    %448 = vector.broadcast %446 : vector<8x1xf32> to vector<8x9xf32>
    %449 = arith.mulf %448, %447 : vector<8x9xf32>
    %450 = arith.addf %445, %449 : vector<8x9xf32>
    %451 = vector.extract_strided_slice %409 {offsets = [0, 8], sizes = [8, 1], strides = [1, 1]} : vector<8x9xf32> to vector<8x1xf32>
    %452 = vector.extract_strided_slice %0 {offsets = [0, 558], sizes = [8, 9], strides = [1, 1]} : vector<8x768xf32> to vector<8x9xf32>
    %453 = vector.broadcast %451 : vector<8x1xf32> to vector<8x9xf32>
    %454 = arith.mulf %453, %452 : vector<8x9xf32>
    %455 = arith.addf %450, %454 : vector<8x9xf32>
    %c54_i32 = arith.constant 54 : i32
    %456 = vector.broadcast %c54_i32 : i32 to vector<9x128xi32>
    %457 = arith.addi %456, %12 : vector<9x128xi32>
    %458 = arith.cmpi eq, %13, %457 : vector<9x128xi32>
    %459 = arith.extui %458 : vector<9x128xi1> to vector<9x128xi32>
    %460 = arith.sitofp %459 : vector<9x128xi32> to vector<9x128xf32>
    %cst_36 = arith.constant dense<0.000000e+00> : vector<8x128xf32>
    %461 = tpu.matmul %455, %460, %cst_36 {dimension_numbers = #tpu.dot_dimension_numbers<[1], [0], [0], [1], [0, 0, 1, 1], [], []>} : vector<8x9xf32>, vector<9x128xf32>, vector<8x128xf32> -> vector<8x128xf32>
    %462 = arith.addf %398, %461 : vector<8x128xf32>
    %463 = vector.extract_strided_slice %11 {offsets = [0, 63], sizes = [8, 9], strides = [1, 1]} : vector<8x128xf32> to vector<8x9xf32>
    %cst_37 = arith.constant dense<0xFF800000> : vector<8xf32>
    %464 = vector.multi_reduction <maximumf>, %463, %cst_37 [1] : vector<8x9xf32> to vector<8xf32>
    %465 = vector.shape_cast %464 : vector<8xf32> to vector<8x1xf32>
    %466 = vector.broadcast %465 : vector<8x1xf32> to vector<8x9xf32>
    %467 = arith.subf %463, %466 : vector<8x9xf32>
    %468 = math.exp %467 : vector<8x9xf32>
    %cst_38 = arith.constant dense<0.000000e+00> : vector<8xf32>
    %469 = vector.multi_reduction <add>, %468, %cst_38 [1] : vector<8x9xf32> to vector<8xf32>
    %470 = vector.shape_cast %469 : vector<8xf32> to vector<8x1xf32>
    %471 = tpu.reciprocal %470 {approx = true} : vector<8x1xf32> -> vector<8x1xf32>
    %472 = vector.broadcast %471 : vector<8x1xf32> to vector<8x9xf32>
    %473 = arith.mulf %468, %472 : vector<8x9xf32>
    %cst_39 = arith.constant 0.000000e+00 : f32
    %474 = vector.broadcast %cst_39 : f32 to vector<8x9xf32>
    %475 = vector.extract_strided_slice %473 {offsets = [0, 0], sizes = [8, 1], strides = [1, 1]} : vector<8x9xf32> to vector<8x1xf32>
    %476 = vector.extract_strided_slice %0 {offsets = [0, 567], sizes = [8, 9], strides = [1, 1]} : vector<8x768xf32> to vector<8x9xf32>
    %477 = vector.broadcast %475 : vector<8x1xf32> to vector<8x9xf32>
    %478 = arith.mulf %477, %476 : vector<8x9xf32>
    %479 = arith.addf %474, %478 : vector<8x9xf32>
    %480 = vector.extract_strided_slice %473 {offsets = [0, 1], sizes = [8, 1], strides = [1, 1]} : vector<8x9xf32> to vector<8x1xf32>
    %481 = vector.extract_strided_slice %0 {offsets = [0, 576], sizes = [8, 9], strides = [1, 1]} : vector<8x768xf32> to vector<8x9xf32>
    %482 = vector.broadcast %480 : vector<8x1xf32> to vector<8x9xf32>
    %483 = arith.mulf %482, %481 : vector<8x9xf32>
    %484 = arith.addf %479, %483 : vector<8x9xf32>
    %485 = vector.extract_strided_slice %473 {offsets = [0, 2], sizes = [8, 1], strides = [1, 1]} : vector<8x9xf32> to vector<8x1xf32>
    %486 = vector.extract_strided_slice %0 {offsets = [0, 585], sizes = [8, 9], strides = [1, 1]} : vector<8x768xf32> to vector<8x9xf32>
    %487 = vector.broadcast %485 : vector<8x1xf32> to vector<8x9xf32>
    %488 = arith.mulf %487, %486 : vector<8x9xf32>
    %489 = arith.addf %484, %488 : vector<8x9xf32>
    %490 = vector.extract_strided_slice %473 {offsets = [0, 3], sizes = [8, 1], strides = [1, 1]} : vector<8x9xf32> to vector<8x1xf32>
    %491 = vector.extract_strided_slice %0 {offsets = [0, 594], sizes = [8, 9], strides = [1, 1]} : vector<8x768xf32> to vector<8x9xf32>
    %492 = vector.broadcast %490 : vector<8x1xf32> to vector<8x9xf32>
    %493 = arith.mulf %492, %491 : vector<8x9xf32>
    %494 = arith.addf %489, %493 : vector<8x9xf32>
    %495 = vector.extract_strided_slice %473 {offsets = [0, 4], sizes = [8, 1], strides = [1, 1]} : vector<8x9xf32> to vector<8x1xf32>
    %496 = vector.extract_strided_slice %0 {offsets = [0, 603], sizes = [8, 9], strides = [1, 1]} : vector<8x768xf32> to vector<8x9xf32>
    %497 = vector.broadcast %495 : vector<8x1xf32> to vector<8x9xf32>
    %498 = arith.mulf %497, %496 : vector<8x9xf32>
    %499 = arith.addf %494, %498 : vector<8x9xf32>
    %500 = vector.extract_strided_slice %473 {offsets = [0, 5], sizes = [8, 1], strides = [1, 1]} : vector<8x9xf32> to vector<8x1xf32>
    %501 = vector.extract_strided_slice %0 {offsets = [0, 612], sizes = [8, 9], strides = [1, 1]} : vector<8x768xf32> to vector<8x9xf32>
    %502 = vector.broadcast %500 : vector<8x1xf32> to vector<8x9xf32>
    %503 = arith.mulf %502, %501 : vector<8x9xf32>
    %504 = arith.addf %499, %503 : vector<8x9xf32>
    %505 = vector.extract_strided_slice %473 {offsets = [0, 6], sizes = [8, 1], strides = [1, 1]} : vector<8x9xf32> to vector<8x1xf32>
    %506 = vector.extract_strided_slice %0 {offsets = [0, 621], sizes = [8, 9], strides = [1, 1]} : vector<8x768xf32> to vector<8x9xf32>
    %507 = vector.broadcast %505 : vector<8x1xf32> to vector<8x9xf32>
    %508 = arith.mulf %507, %506 : vector<8x9xf32>
    %509 = arith.addf %504, %508 : vector<8x9xf32>
    %510 = vector.extract_strided_slice %473 {offsets = [0, 7], sizes = [8, 1], strides = [1, 1]} : vector<8x9xf32> to vector<8x1xf32>
    %511 = vector.extract_strided_slice %0 {offsets = [0, 630], sizes = [8, 9], strides = [1, 1]} : vector<8x768xf32> to vector<8x9xf32>
    %512 = vector.broadcast %510 : vector<8x1xf32> to vector<8x9xf32>
    %513 = arith.mulf %512, %511 : vector<8x9xf32>
    %514 = arith.addf %509, %513 : vector<8x9xf32>
    %515 = vector.extract_strided_slice %473 {offsets = [0, 8], sizes = [8, 1], strides = [1, 1]} : vector<8x9xf32> to vector<8x1xf32>
    %516 = vector.extract_strided_slice %0 {offsets = [0, 639], sizes = [8, 9], strides = [1, 1]} : vector<8x768xf32> to vector<8x9xf32>
    %517 = vector.broadcast %515 : vector<8x1xf32> to vector<8x9xf32>
    %518 = arith.mulf %517, %516 : vector<8x9xf32>
    %519 = arith.addf %514, %518 : vector<8x9xf32>
    %c63_i32 = arith.constant 63 : i32
    %520 = vector.broadcast %c63_i32 : i32 to vector<9x128xi32>
    %521 = arith.addi %520, %12 : vector<9x128xi32>
    %522 = arith.cmpi eq, %13, %521 : vector<9x128xi32>
    %523 = arith.extui %522 : vector<9x128xi1> to vector<9x128xi32>
    %524 = arith.sitofp %523 : vector<9x128xi32> to vector<9x128xf32>
    %cst_40 = arith.constant dense<0.000000e+00> : vector<8x128xf32>
    %525 = tpu.matmul %519, %524, %cst_40 {dimension_numbers = #tpu.dot_dimension_numbers<[1], [0], [0], [1], [0, 0, 1, 1], [], []>} : vector<8x9xf32>, vector<9x128xf32>, vector<8x128xf32> -> vector<8x128xf32>
    %526 = arith.addf %462, %525 : vector<8x128xf32>
    %527 = vector.extract_strided_slice %11 {offsets = [0, 72], sizes = [8, 9], strides = [1, 1]} : vector<8x128xf32> to vector<8x9xf32>
    %cst_41 = arith.constant dense<0xFF800000> : vector<8xf32>
    %528 = vector.multi_reduction <maximumf>, %527, %cst_41 [1] : vector<8x9xf32> to vector<8xf32>
    %529 = vector.shape_cast %528 : vector<8xf32> to vector<8x1xf32>
    %530 = vector.broadcast %529 : vector<8x1xf32> to vector<8x9xf32>
    %531 = arith.subf %527, %530 : vector<8x9xf32>
    %532 = math.exp %531 : vector<8x9xf32>
    %cst_42 = arith.constant dense<0.000000e+00> : vector<8xf32>
    %533 = vector.multi_reduction <add>, %532, %cst_42 [1] : vector<8x9xf32> to vector<8xf32>
    %534 = vector.shape_cast %533 : vector<8xf32> to vector<8x1xf32>
    %535 = tpu.reciprocal %534 {approx = true} : vector<8x1xf32> -> vector<8x1xf32>
    %536 = vector.broadcast %535 : vector<8x1xf32> to vector<8x9xf32>
    %537 = arith.mulf %532, %536 : vector<8x9xf32>
    %cst_43 = arith.constant 0.000000e+00 : f32
    %538 = vector.broadcast %cst_43 : f32 to vector<8x9xf32>
    %539 = vector.extract_strided_slice %537 {offsets = [0, 0], sizes = [8, 1], strides = [1, 1]} : vector<8x9xf32> to vector<8x1xf32>
    %540 = vector.extract_strided_slice %0 {offsets = [0, 648], sizes = [8, 9], strides = [1, 1]} : vector<8x768xf32> to vector<8x9xf32>
    %541 = vector.broadcast %539 : vector<8x1xf32> to vector<8x9xf32>
    %542 = arith.mulf %541, %540 : vector<8x9xf32>
    %543 = arith.addf %538, %542 : vector<8x9xf32>
    %544 = vector.extract_strided_slice %537 {offsets = [0, 1], sizes = [8, 1], strides = [1, 1]} : vector<8x9xf32> to vector<8x1xf32>
    %545 = vector.extract_strided_slice %0 {offsets = [0, 657], sizes = [8, 9], strides = [1, 1]} : vector<8x768xf32> to vector<8x9xf32>
    %546 = vector.broadcast %544 : vector<8x1xf32> to vector<8x9xf32>
    %547 = arith.mulf %546, %545 : vector<8x9xf32>
    %548 = arith.addf %543, %547 : vector<8x9xf32>
    %549 = vector.extract_strided_slice %537 {offsets = [0, 2], sizes = [8, 1], strides = [1, 1]} : vector<8x9xf32> to vector<8x1xf32>
    %550 = vector.extract_strided_slice %0 {offsets = [0, 666], sizes = [8, 9], strides = [1, 1]} : vector<8x768xf32> to vector<8x9xf32>
    %551 = vector.broadcast %549 : vector<8x1xf32> to vector<8x9xf32>
    %552 = arith.mulf %551, %550 : vector<8x9xf32>
    %553 = arith.addf %548, %552 : vector<8x9xf32>
    %554 = vector.extract_strided_slice %537 {offsets = [0, 3], sizes = [8, 1], strides = [1, 1]} : vector<8x9xf32> to vector<8x1xf32>
    %555 = vector.extract_strided_slice %0 {offsets = [0, 675], sizes = [8, 9], strides = [1, 1]} : vector<8x768xf32> to vector<8x9xf32>
    %556 = vector.broadcast %554 : vector<8x1xf32> to vector<8x9xf32>
    %557 = arith.mulf %556, %555 : vector<8x9xf32>
    %558 = arith.addf %553, %557 : vector<8x9xf32>
    %559 = vector.extract_strided_slice %537 {offsets = [0, 4], sizes = [8, 1], strides = [1, 1]} : vector<8x9xf32> to vector<8x1xf32>
    %560 = vector.extract_strided_slice %0 {offsets = [0, 684], sizes = [8, 9], strides = [1, 1]} : vector<8x768xf32> to vector<8x9xf32>
    %561 = vector.broadcast %559 : vector<8x1xf32> to vector<8x9xf32>
    %562 = arith.mulf %561, %560 : vector<8x9xf32>
    %563 = arith.addf %558, %562 : vector<8x9xf32>
    %564 = vector.extract_strided_slice %537 {offsets = [0, 5], sizes = [8, 1], strides = [1, 1]} : vector<8x9xf32> to vector<8x1xf32>
    %565 = vector.extract_strided_slice %0 {offsets = [0, 693], sizes = [8, 9], strides = [1, 1]} : vector<8x768xf32> to vector<8x9xf32>
    %566 = vector.broadcast %564 : vector<8x1xf32> to vector<8x9xf32>
    %567 = arith.mulf %566, %565 : vector<8x9xf32>
    %568 = arith.addf %563, %567 : vector<8x9xf32>
    %569 = vector.extract_strided_slice %537 {offsets = [0, 6], sizes = [8, 1], strides = [1, 1]} : vector<8x9xf32> to vector<8x1xf32>
    %570 = vector.extract_strided_slice %0 {offsets = [0, 702], sizes = [8, 9], strides = [1, 1]} : vector<8x768xf32> to vector<8x9xf32>
    %571 = vector.broadcast %569 : vector<8x1xf32> to vector<8x9xf32>
    %572 = arith.mulf %571, %570 : vector<8x9xf32>
    %573 = arith.addf %568, %572 : vector<8x9xf32>
    %574 = vector.extract_strided_slice %537 {offsets = [0, 7], sizes = [8, 1], strides = [1, 1]} : vector<8x9xf32> to vector<8x1xf32>
    %575 = vector.extract_strided_slice %0 {offsets = [0, 711], sizes = [8, 9], strides = [1, 1]} : vector<8x768xf32> to vector<8x9xf32>
    %576 = vector.broadcast %574 : vector<8x1xf32> to vector<8x9xf32>
    %577 = arith.mulf %576, %575 : vector<8x9xf32>
    %578 = arith.addf %573, %577 : vector<8x9xf32>
    %579 = vector.extract_strided_slice %537 {offsets = [0, 8], sizes = [8, 1], strides = [1, 1]} : vector<8x9xf32> to vector<8x1xf32>
    %580 = vector.extract_strided_slice %0 {offsets = [0, 720], sizes = [8, 9], strides = [1, 1]} : vector<8x768xf32> to vector<8x9xf32>
    %581 = vector.broadcast %579 : vector<8x1xf32> to vector<8x9xf32>
    %582 = arith.mulf %581, %580 : vector<8x9xf32>
    %583 = arith.addf %578, %582 : vector<8x9xf32>
    %c72_i32 = arith.constant 72 : i32
    %584 = vector.broadcast %c72_i32 : i32 to vector<9x128xi32>
    %585 = arith.addi %584, %12 : vector<9x128xi32>
    %586 = arith.cmpi eq, %13, %585 : vector<9x128xi32>
    %587 = arith.extui %586 : vector<9x128xi1> to vector<9x128xi32>
    %588 = arith.sitofp %587 : vector<9x128xi32> to vector<9x128xf32>
    %cst_44 = arith.constant dense<0.000000e+00> : vector<8x128xf32>
    %589 = tpu.matmul %583, %588, %cst_44 {dimension_numbers = #tpu.dot_dimension_numbers<[1], [0], [0], [1], [0, 0, 1, 1], [], []>} : vector<8x9xf32>, vector<9x128xf32>, vector<8x128xf32> -> vector<8x128xf32>
    %590 = arith.addf %526, %589 : vector<8x128xf32>
    %c0_45 = arith.constant 0 : index
    %c0_46 = arith.constant 0 : index
    %591 = vector.load %arg6[%c0_45, %c0_46] : memref<8x128xf32, #tpu.memory_space<vmem>>, vector<8x128xf32>
    tpu.vector_store %arg6[%c0_45, %c0_46], %590 {strides = array<i32>} : memref<8x128xf32, #tpu.memory_space<vmem>>, vector<8x128xf32>,
    return
  }
  func.func @transform_0(%arg0: i32) -> (i32, i32) {
    %c0_i32 = arith.constant 0 : i32
    %c0_i32_0 = arith.constant 0 : i32
    return %arg0, %c0_i32 : i32, i32
  }
  func.func @transform_1(%arg0: i32) -> (i32, i32) {
    %c0_i32 = arith.constant 0 : i32
    %c0_i32_0 = arith.constant 0 : i32
    return %arg0, %c0_i32 : i32, i32
  }
  func.func @transform_2(%arg0: i32) -> (i32, i32) {
    %c0_i32 = arith.constant 0 : i32
    %c0_i32_0 = arith.constant 0 : i32
    %c0_i32_1 = arith.constant 0 : i32
    return %c0_i32, %c0_i32_0 : i32, i32
  }
  func.func @transform_3(%arg0: i32) -> (i32, i32) {
    %c0_i32 = arith.constant 0 : i32
    %c0_i32_0 = arith.constant 0 : i32
    %c0_i32_1 = arith.constant 0 : i32
    return %c0_i32, %c0_i32_0 : i32, i32
  }
  func.func @transform_4(%arg0: i32) -> i32 {
    %c0_i32 = arith.constant 0 : i32
    %c0_i32_0 = arith.constant 0 : i32
    return %c0_i32 : i32
  }
  func.func @transform_5(%arg0: i32) -> (i32, i32) {
    %c0_i32 = arith.constant 0 : i32
    %c0_i32_0 = arith.constant 0 : i32
    return %arg0, %c0_i32 : i32, i32
  }
}

</mosaic_0001>

<llo_original>
// kernel: attention_encoder_forward.1
$region0: #{attention_encoder_forward.1}
  #allocation0 [shape = 'u32[]', space=smem, size = 0x4, offset = 0x4, fixed_abs, tag = 'smem constant byte address 0x4 - core index']
  #allocation1 [shape = 'u32[72,128]{1,0:T(1,128)}', space=vmem, size = 0x9000, scoped, tag = 'internal scratch']
  #allocation2 [shape = 'f32[1]{0:T(128)S(6)}', space=smem, size = 0x200, scoped, tag = 'scoped memory for attention_encoder_forward.1']
  %s0 = inlined_call_operand.vmem [shape: f32[8,768], index: 0, kind: input, shape index: {}]
  %s1 = inlined_call_operand.vmem [shape: f32[8,128], index: 1, kind: input, shape index: {}]
  %s2 = inlined_call_operand.vmem [shape: bf16[768,128], index: 2, kind: input, shape index: {}]
  %s3 = inlined_call_operand.vmem [shape: f32[1,128], index: 3, kind: input, shape index: {}]
  %s4 = inlined_call_operand.<no memory space> [shape: f32[1], index: 4, kind: input, shape index: {}]
  %s5 = inlined_call_operand.vmem [shape: f32[8,128], index: 5, kind: output, shape index: {}]
  %s6 = sld [smem:[#allocation0]]
  $region30: #{attention_encoder_forward.1} parent=0
    _
  %s8 = ssub.s32 1, %s6
  %s9 = scalar_select 0, %s8, %s6
  %10 = sst [smem:[#allocation2]] %s4
  // Predicated region
  $region2: #{attention_encoder_forward.1} parent=0 // pred_check
    _
  $region3: #{attention_encoder_forward.1} parent=0 // pred_check_branch
    %12 = sbr.rel (0) target = $region5
  $region4: #{attention_encoder_forward.1} parent=0 // pred_region
    _
  $region5: #{attention_encoder_forward.1} parent=0 // pred_fallthru
    _
  // Predicated region
  $region6: #{attention_encoder_forward.1} parent=0 // pred_check
    _
  $region7: #{attention_encoder_forward.1} parent=0 // pred_check_branch
    %14 = sbr.rel (0) target = $region9
  $region8: #{attention_encoder_forward.1} parent=0 // pred_region
    _
  $region9: #{attention_encoder_forward.1} parent=0 // pred_fallthru
    _
  // Predicated region
  $region10: #{attention_encoder_forward.1} parent=0 // pred_check
    _
  $region11: #{attention_encoder_forward.1} parent=0 // pred_check_branch
    %16 = sbr.rel (0) target = $region13
  $region12: #{attention_encoder_forward.1} parent=0 // pred_region
    _
  $region13: #{attention_encoder_forward.1} parent=0 // pred_fallthru
    _
  // Predicated region
  $region14: #{attention_encoder_forward.1} parent=0 // pred_check
    _
  $region15: #{attention_encoder_forward.1} parent=0 // pred_check_branch
    %18 = sbr.rel (0) target = $region17
  $region16: #{attention_encoder_forward.1} parent=0 // pred_region
    _
  $region17: #{attention_encoder_forward.1} parent=0 // pred_fallthru
    _
  // Predicated region
  $region18: #{attention_encoder_forward.1} parent=0 // pred_check
    _
  $region19: #{attention_encoder_forward.1} parent=0 // pred_check_branch
    %20 = sbr.rel (0) target = $region21
  $region20: #{attention_encoder_forward.1} parent=0 // pred_region
    _
  $region21: #{attention_encoder_forward.1} parent=0 // pred_fallthru
    _
  %v21 = vld [vmem:[%s0] sm:$0xff]
  %v22 = vld [vmem:[%s0 + $0x8] sm:$0xff]
  %v23 = vld [vmem:[%s0 + $0x10] sm:$0xff]
  %v24 = vld [vmem:[%s0 + $0x18] sm:$0xff]
  %v25 = vld [vmem:[%s0 + $0x20] sm:$0xff]
  %v26 = vld [vmem:[%s0 + $0x28] sm:$0xff]
  %v27 = vpack.c.bf16 %v21, %v21
  %v28 = vpack.c.bf16 %v22, %v22
  %v29 = vpack.c.bf16 %v23, %v23
  %v30 = vpack.c.bf16 %v24, %v24
  %v31 = vpack.c.bf16 %v25, %v25
  %v32 = vpack.c.bf16 %v26, %v26
  %v33 = vld [vmem:[%s2] sm:$0xf]
  %v34 = vld [vmem:[%s2 + $0x4] sm:$0xf]
  %v35 = vld [vmem:[%s2 + $0x8] sm:$0xf]
  %v36 = vld [vmem:[%s2 + $0xc] sm:$0xf]
  %v37 = vld [vmem:[%s2 + $0x10] sm:$0xf]
  %v38 = vld [vmem:[%s2 + $0x14] sm:$0xf]
  %v39 = vld [vmem:[%s2 + $0x18] sm:$0xf]
  %v40 = vld [vmem:[%s2 + $0x1c] sm:$0xf]
  %v41 = vld [vmem:[%s2 + $0x20] sm:$0xf]
  %v42 = vld [vmem:[%s2 + $0x24] sm:$0xf]
  %v43 = vld [vmem:[%s2 + $0x28] sm:$0xf]
  %v44 = vld [vmem:[%s2 + $0x2c] sm:$0xf]
  %v45 = vld [vmem:[%s2 + $0x30] sm:$0xf]
  %v46 = vld [vmem:[%s2 + $0x34] sm:$0xf]
  %v47 = vld [vmem:[%s2 + $0x38] sm:$0xf]
  %v48 = vld [vmem:[%s2 + $0x3c] sm:$0xf]
  %v49 = vld [vmem:[%s2 + $0x40] sm:$0xf]
  %v50 = vld [vmem:[%s2 + $0x44] sm:$0xf]
  %v51 = vld [vmem:[%s2 + $0x48] sm:$0xf]
  %v52 = vld [vmem:[%s2 + $0x4c] sm:$0xf]
  %v53 = vld [vmem:[%s2 + $0x50] sm:$0xf]
  %v54 = vld [vmem:[%s2 + $0x54] sm:$0xf]
  %v55 = vld [vmem:[%s2 + $0x58] sm:$0xf]
  %v56 = vld [vmem:[%s2 + $0x5c] sm:$0xf]
  %v57 = vld [vmem:[%s2 + $0x60] sm:$0xf]
  %v58 = vld [vmem:[%s2 + $0x64] sm:$0xf]
  %v59 = vld [vmem:[%s2 + $0x68] sm:$0xf]
  %v60 = vld [vmem:[%s2 + $0x6c] sm:$0xf]
  %v61 = vld [vmem:[%s2 + $0x70] sm:$0xf]
  %v62 = vld [vmem:[%s2 + $0x74] sm:$0xf]
  %v63 = vld [vmem:[%s2 + $0x78] sm:$0xf]
  %v64 = vld [vmem:[%s2 + $0x7c] sm:$0xf]
  %v65 = vld [vmem:[%s2 + $0x80] sm:$0xf]
  %v66 = vld [vmem:[%s2 + $0x84] sm:$0xf]
  %v67 = vld [vmem:[%s2 + $0x88] sm:$0xf]
  %v68 = vld [vmem:[%s2 + $0x8c] sm:$0xf]
  %v69 = vld [vmem:[%s2 + $0x90] sm:$0xf]
  %v70 = vld [vmem:[%s2 + $0x94] sm:$0xf]
  %v71 = vld [vmem:[%s2 + $0x98] sm:$0xf]
  %v72 = vld [vmem:[%s2 + $0x9c] sm:$0xf]
  %v73 = vld [vmem:[%s2 + $0xa0] sm:$0xf]
  %v74 = vld [vmem:[%s2 + $0xa4] sm:$0xf]
  %v75 = vld [vmem:[%s2 + $0xa8] sm:$0xf]
  %v76 = vld [vmem:[%s2 + $0xac] sm:$0xf]
  %v77 = vld [vmem:[%s2 + $0xb0] sm:$0xf]
  %v78 = vld [vmem:[%s2 + $0xb4] sm:$0xf]
  %v79 = vld [vmem:[%s2 + $0xb8] sm:$0xf]
  %v80 = vld [vmem:[%s2 + $0xbc] sm:$0xf]
  %v81 = vld [vmem:[%s2 + $0xc0] sm:$0xf]
  %v82 = vld [vmem:[%s2 + $0xc4] sm:$0xf]
  %v83 = vld [vmem:[%s2 + $0xc8] sm:$0xf]
  %v84 = vld [vmem:[%s2 + $0xcc] sm:$0xf]
  %v85 = vld [vmem:[%s2 + $0xd0] sm:$0xf]
  %v86 = vld [vmem:[%s2 + $0xd4] sm:$0xf]
  %v87 = vld [vmem:[%s2 + $0xd8] sm:$0xf]
  %v88 = vld [vmem:[%s2 + $0xdc] sm:$0xf]
  %v89 = vld [vmem:[%s2 + $0xe0] sm:$0xf]
  %v90 = vld [vmem:[%s2 + $0xe4] sm:$0xf]
  %v91 = vld [vmem:[%s2 + $0xe8] sm:$0xf]
  %v92 = vld [vmem:[%s2 + $0xec] sm:$0xf]
  %v93 = vld [vmem:[%s2 + $0xf0] sm:$0xf]
  %v94 = vld [vmem:[%s2 + $0xf4] sm:$0xf]
  %v95 = vld [vmem:[%s2 + $0xf8] sm:$0xf]
  %v96 = vld [vmem:[%s2 + $0xfc] sm:$0xf]
  %v97 = vld [vmem:[%s2 + $0x100] sm:$0xf]
  %v98 = vld [vmem:[%s2 + $0x104] sm:$0xf]
  %v99 = vld [vmem:[%s2 + $0x108] sm:$0xf]
  %v100 = vld [vmem:[%s2 + $0x10c] sm:$0xf]
  %v101 = vld [vmem:[%s2 + $0x110] sm:$0xf]
  %v102 = vld [vmem:[%s2 + $0x114] sm:$0xf]
  %v103 = vld [vmem:[%s2 + $0x118] sm:$0xf]
  %v104 = vld [vmem:[%s2 + $0x11c] sm:$0xf]
  %v105 = vld [vmem:[%s2 + $0x120] sm:$0xf]
  %v106 = vld [vmem:[%s2 + $0x124] sm:$0xf]
  %v107 = vld [vmem:[%s2 + $0x128] sm:$0xf]
  %v108 = vld [vmem:[%s2 + $0x12c] sm:$0xf]
  %v109 = vld [vmem:[%s2 + $0x130] sm:$0xf]
  %v110 = vld [vmem:[%s2 + $0x134] sm:$0xf]
  %v111 = vld [vmem:[%s2 + $0x138] sm:$0xf]
  %v112 = vld [vmem:[%s2 + $0x13c] sm:$0xf]
  %v113 = vld [vmem:[%s2 + $0x140] sm:$0xf]
  %v114 = vld [vmem:[%s2 + $0x144] sm:$0xf]
  %v115 = vld [vmem:[%s2 + $0x148] sm:$0xf]
  %v116 = vld [vmem:[%s2 + $0x14c] sm:$0xf]
  %v117 = vld [vmem:[%s2 + $0x150] sm:$0xf]
  %v118 = vld [vmem:[%s2 + $0x154] sm:$0xf]
  %v119 = vld [vmem:[%s2 + $0x158] sm:$0xf]
  %v120 = vld [vmem:[%s2 + $0x15c] sm:$0xf]
  %v121 = vld [vmem:[%s2 + $0x160] sm:$0xf]
  %v122 = vld [vmem:[%s2 + $0x164] sm:$0xf]
  %v123 = vld [vmem:[%s2 + $0x168] sm:$0xf]
  %v124 = vld [vmem:[%s2 + $0x16c] sm:$0xf]
  %v125 = vld [vmem:[%s2 + $0x170] sm:$0xf]
  %v126 = vld [vmem:[%s2 + $0x174] sm:$0xf]
  %v127 = vld [vmem:[%s2 + $0x178] sm:$0xf]
  %v128 = vld [vmem:[%s2 + $0x17c] sm:$0xf]
  %v129 = vld [vmem:[%s3] sm:$0x1]
  %v131 = vperm.slane %v129, 0
  %v229 = vunpack.c.l.b16 %v33
  %v230 = vunpack.c.l.b16 %v34
  %v231 = vunpack.c.l.b16 %v35
  %v232 = vunpack.c.l.b16 %v36
  %v233 = vunpack.c.l.b16 %v37
  %v234 = vunpack.c.l.b16 %v38
  %v235 = vunpack.c.l.b16 %v39
  %v236 = vunpack.c.l.b16 %v40
  %v237 = vunpack.c.l.b16 %v41
  %v238 = vunpack.c.l.b16 %v42
  %v239 = vunpack.c.l.b16 %v43
  %v240 = vunpack.c.l.b16 %v44
  %v241 = vunpack.c.l.b16 %v45
  %v242 = vunpack.c.l.b16 %v46
  %v243 = vunpack.c.l.b16 %v47
  %v244 = vunpack.c.l.b16 %v48
  %v245 = vunpack.c.l.b16 %v49
  %v246 = vunpack.c.l.b16 %v50
  %v247 = vunpack.c.l.b16 %v51
  %v248 = vunpack.c.l.b16 %v52
  %v249 = vunpack.c.l.b16 %v53
  %v250 = vunpack.c.l.b16 %v54
  %v251 = vunpack.c.l.b16 %v55
  %v252 = vunpack.c.l.b16 %v56
  %v253 = vunpack.c.l.b16 %v57
  %v254 = vunpack.c.l.b16 %v58
  %v255 = vunpack.c.l.b16 %v59
  %v256 = vunpack.c.l.b16 %v60
  %v257 = vunpack.c.l.b16 %v61
  %v258 = vunpack.c.l.b16 %v62
  %v259 = vunpack.c.l.b16 %v63
  %v260 = vunpack.c.l.b16 %v64
  %v261 = vunpack.c.l.b16 %v65
  %v262 = vunpack.c.l.b16 %v66
  %v263 = vunpack.c.l.b16 %v67
  %v264 = vunpack.c.l.b16 %v68
  %v265 = vunpack.c.l.b16 %v69
  %v266 = vunpack.c.l.b16 %v70
  %v267 = vunpack.c.l.b16 %v71
  %v268 = vunpack.c.l.b16 %v72
  %v269 = vunpack.c.l.b16 %v73
  %v270 = vunpack.c.l.b16 %v74
  %v271 = vunpack.c.l.b16 %v75
  %v272 = vunpack.c.l.b16 %v76
  %v273 = vunpack.c.l.b16 %v77
  %v274 = vunpack.c.l.b16 %v78
  %v275 = vunpack.c.l.b16 %v79
  %v276 = vunpack.c.l.b16 %v80
  %v277 = vunpack.c.l.b16 %v81
  %v278 = vunpack.c.l.b16 %v82
  %v279 = vunpack.c.l.b16 %v83
  %v280 = vunpack.c.l.b16 %v84
  %v281 = vunpack.c.l.b16 %v85
  %v282 = vunpack.c.l.b16 %v86
  %v283 = vunpack.c.l.b16 %v87
  %v284 = vunpack.c.l.b16 %v88
  %v285 = vunpack.c.l.b16 %v89
  %v286 = vunpack.c.l.b16 %v90
  %v287 = vunpack.c.l.b16 %v91
  %v288 = vunpack.c.l.b16 %v92
  %v289 = vunpack.c.l.b16 %v93
  %v290 = vunpack.c.l.b16 %v94
  %v291 = vunpack.c.l.b16 %v95
  %v292 = vunpack.c.l.b16 %v96
  %v293 = vunpack.c.l.b16 %v97
  %v294 = vunpack.c.l.b16 %v98
  %v295 = vunpack.c.l.b16 %v99
  %v296 = vunpack.c.l.b16 %v100
  %v297 = vunpack.c.l.b16 %v101
  %v298 = vunpack.c.l.b16 %v102
  %v299 = vunpack.c.l.b16 %v103
  %v300 = vunpack.c.l.b16 %v104
  %v301 = vunpack.c.l.b16 %v105
  %v302 = vunpack.c.l.b16 %v106
  %v303 = vunpack.c.l.b16 %v107
  %v304 = vunpack.c.l.b16 %v108
  %v305 = vunpack.c.l.b16 %v109
  %v306 = vunpack.c.l.b16 %v110
  %v307 = vunpack.c.l.b16 %v111
  %v308 = vunpack.c.l.b16 %v112
  %v309 = vunpack.c.l.b16 %v113
  %v310 = vunpack.c.l.b16 %v114
  %v311 = vunpack.c.l.b16 %v115
  %v312 = vunpack.c.l.b16 %v116
  %v313 = vunpack.c.l.b16 %v117
  %v314 = vunpack.c.l.b16 %v118
  %v315 = vunpack.c.l.b16 %v119
  %v316 = vunpack.c.l.b16 %v120
  %v317 = vunpack.c.l.b16 %v121
  %v318 = vunpack.c.l.b16 %v122
  %v319 = vunpack.c.l.b16 %v123
  %v320 = vunpack.c.l.b16 %v124
  %v321 = vunpack.c.l.b16 %v125
  %v322 = vunpack.c.l.b16 %v126
  %v323 = vunpack.c.l.b16 %v127
  %v324 = vunpack.c.l.b16 %v128
  %v325 = vpack.c.b16 %v230, %v229
  %v326 = vpack.c.b16 %v232, %v231
  %v327 = vpack.c.b16 %v234, %v233
  %v328 = vpack.c.b16 %v236, %v235
  %v329 = vpack.c.b16 %v238, %v237
  %v330 = vpack.c.b16 %v240, %v239
  %v331 = vpack.c.b16 %v242, %v241
  %v332 = vpack.c.b16 %v244, %v243
  %v333 = vpack.c.b16 %v246, %v245
  %v334 = vpack.c.b16 %v248, %v247
  %v335 = vpack.c.b16 %v250, %v249
  %v336 = vpack.c.b16 %v252, %v251
  %v337 = vpack.c.b16 %v254, %v253
  %v338 = vpack.c.b16 %v256, %v255
  %v339 = vpack.c.b16 %v258, %v257
  %v340 = vpack.c.b16 %v260, %v259
  %v341 = vpack.c.b16 %v262, %v261
  %v342 = vpack.c.b16 %v264, %v263
  %v343 = vpack.c.b16 %v266, %v265
  %v344 = vpack.c.b16 %v268, %v267
  %v345 = vpack.c.b16 %v270, %v269
  %v346 = vpack.c.b16 %v272, %v271
  %v347 = vpack.c.b16 %v274, %v273
  %v348 = vpack.c.b16 %v276, %v275
  %v349 = vpack.c.b16 %v278, %v277
  %v350 = vpack.c.b16 %v280, %v279
  %v351 = vpack.c.b16 %v282, %v281
  %v352 = vpack.c.b16 %v284, %v283
  %v353 = vpack.c.b16 %v286, %v285
  %v354 = vpack.c.b16 %v288, %v287
  %v355 = vpack.c.b16 %v290, %v289
  %v356 = vpack.c.b16 %v292, %v291
  %v357 = vpack.c.b16 %v294, %v293
  %v358 = vpack.c.b16 %v296, %v295
  %v359 = vpack.c.b16 %v298, %v297
  %v360 = vpack.c.b16 %v300, %v299
  %v361 = vpack.c.b16 %v302, %v301
  %v362 = vpack.c.b16 %v304, %v303
  %v363 = vpack.c.b16 %v306, %v305
  %v364 = vpack.c.b16 %v308, %v307
  %v365 = vpack.c.b16 %v310, %v309
  %v366 = vpack.c.b16 %v312, %v311
  %v367 = vpack.c.b16 %v314, %v313
  %v368 = vpack.c.b16 %v316, %v315
  %v369 = vpack.c.b16 %v318, %v317
  %v370 = vpack.c.b16 %v320, %v319
  %v371 = vpack.c.b16 %v322, %v321
  %v372 = vpack.c.b16 %v324, %v323
  %421 = vmatpush.bf16.msra.mxu0 %v332
  %422 = vmatpush.bf16.msra.mxu0 %v331
  %423 = vmatpush.bf16.msra.mxu0 %v330
  %424 = vmatpush.bf16.msra.mxu0 %v329
  %425 = vmatpush.bf16.msra.mxu0 %v328
  %426 = vmatpush.bf16.msra.mxu0 %v327
  %427 = vmatpush.bf16.msra.mxu0 %v326
  %428 = vmatpush.bf16.msra.mxu0 %v325
  %429 = vmatmul.bf16.gmra.mxu0 %v27
  %v430 = vpop.f32.mrf.mxu0
  %v431 = vadd.f32 %v131, %v430
  %v432 = vpop.f32.mrf.mxu0
  %433 = vdwg.mxu0
  %434 = vmatpush.bf16.msra.mxu0 %v340
  %435 = vmatpush.bf16.msra.mxu0 %v339
  %436 = vmatpush.bf16.msra.mxu0 %v338
  %437 = vmatpush.bf16.msra.mxu0 %v337
  %438 = vmatpush.bf16.msra.mxu0 %v336
  %439 = vmatpush.bf16.msra.mxu0 %v335
  %440 = vmatpush.bf16.msra.mxu0 %v334
  %441 = vmatpush.bf16.msra.mxu0 %v333
  %442 = vmatmul.bf16.gmra.mxu0 %v28
  %v443 = vpop.f32.mrf.mxu0
  %v444 = vadd.f32 %v431, %v443
  %v445 = vpop.f32.mrf.mxu0
  %446 = vdwg.mxu0
  %447 = vmatpush.bf16.msra.mxu0 %v348
  %448 = vmatpush.bf16.msra.mxu0 %v347
  %449 = vmatpush.bf16.msra.mxu0 %v346
  %450 = vmatpush.bf16.msra.mxu0 %v345
  %451 = vmatpush.bf16.msra.mxu0 %v344
  %452 = vmatpush.bf16.msra.mxu0 %v343
  %453 = vmatpush.bf16.msra.mxu0 %v342
  %454 = vmatpush.bf16.msra.mxu0 %v341
  %455 = vmatmul.bf16.gmra.mxu0 %v29
  %v456 = vpop.f32.mrf.mxu0
  %v457 = vadd.f32 %v444, %v456
  %v458 = vpop.f32.mrf.mxu0
  %459 = vdwg.mxu0
  %460 = vmatpush.bf16.msra.mxu0 %v356
  %461 = vmatpush.bf16.msra.mxu0 %v355
  %462 = vmatpush.bf16.msra.mxu0 %v354
  %463 = vmatpush.bf16.msra.mxu0 %v353
  %464 = vmatpush.bf16.msra.mxu0 %v352
  %465 = vmatpush.bf16.msra.mxu0 %v351
  %466 = vmatpush.bf16.msra.mxu0 %v350
  %467 = vmatpush.bf16.msra.mxu0 %v349
  %468 = vmatmul.bf16.gmra.mxu0 %v30
  %v469 = vpop.f32.mrf.mxu0
  %v470 = vadd.f32 %v457, %v469
  %v471 = vpop.f32.mrf.mxu0
  %472 = vdwg.mxu0
  %473 = vmatpush.bf16.msra.mxu0 %v364
  %474 = vmatpush.bf16.msra.mxu0 %v363
  %475 = vmatpush.bf16.msra.mxu0 %v362
  %476 = vmatpush.bf16.msra.mxu0 %v361
  %477 = vmatpush.bf16.msra.mxu0 %v360
  %478 = vmatpush.bf16.msra.mxu0 %v359
  %479 = vmatpush.bf16.msra.mxu0 %v358
  %480 = vmatpush.bf16.msra.mxu0 %v357
  %481 = vmatmul.bf16.gmra.mxu0 %v31
  %v482 = vpop.f32.mrf.mxu0
  %v483 = vadd.f32 %v470, %v482
  %v484 = vpop.f32.mrf.mxu0
  %485 = vdwg.mxu0
  %486 = vmatpush.bf16.msra.mxu0 %v372
  %487 = vmatpush.bf16.msra.mxu0 %v371
  %488 = vmatpush.bf16.msra.mxu0 %v370
  %489 = vmatpush.bf16.msra.mxu0 %v369
  %490 = vmatpush.bf16.msra.mxu0 %v368
  %491 = vmatpush.bf16.msra.mxu0 %v367
  %492 = vmatpush.bf16.msra.mxu0 %v366
  %493 = vmatpush.bf16.msra.mxu0 %v365
  %494 = vmatmul.bf16.gmra.mxu0 %v32
  %v495 = vpop.f32.mrf.mxu0
  %v496 = vadd.f32 %v483, %v495
  %v497 = vpop.f32.mrf.mxu0
  %498 = vdwg.mxu0
  %v499 = vld [vmem:[%s1] sm:$0xff]
  %v500 = vadd.f32 %v496, %v499
  %s501 = sld [smem:[#allocation2]]
  %v502 = vstv %s501
  %v503 = vmul.f32 %v500, %v502
  %v504 = vlaneseq
  %v505 = vshrl.u32 %v504, 7
  %v506 = vadd.s32 %v505, 8
  %v507 = vlaneseq
  %v508 = vand.u32 %v507, 127
  %vm509 = vcmask 72704
  %v510 = vsel %vm509, %v503, -inf
  %511 = vmax.xlane.f32.xlu0 %v510
  %v512 = vpop.xlane.xlu0 %511
  %v513 = vsub.f32 %v503, %v512
  %v514 = vmul.f32 %v513, 1.442695
  %v515 = vpow.pop %v514
  %v516 = vsel %vm509, %v515, 0.0
  %517 = vadd.xlane.f32.xlu0 %v516
  %v518 = vpop.xlane.xlu0 %517
  %v519 = vrcp.pop %v518
  %v520 = vmul.f32 %v515, %v519
  %522 = vset.pattern.permute.xlu0 0
  %523 = vperm.xlu0 %522, %v520
  %v524 = vpop.permute.xlu0 %523
  %v526 = vmul.f32 %v524, %v21
  %v527 = vadd.f32 %v526, 0.0
  %528 = vset.pattern.permute.xlu0 1
  %529 = vperm.xlu0 %528, %v520
  %v530 = vpop.permute.xlu0 %529
  %v532 = vmul.f32 %v530, %v21
  %534 = vrot.lane.b32.xlu0 %v532, 119
  %v535 = vpop.permute.xlu0 %534
  %v537 = vadd.f32 %v527, %v535
  %538 = vset.pattern.permute.xlu0 2
  %539 = vperm.xlu0 %538, %v520
  %v540 = vpop.permute.xlu0 %539
  %v542 = vmul.f32 %v540, %v21
  %544 = vrot.lane.b32.xlu0 %v542, 110
  %v545 = vpop.permute.xlu0 %544
  %v547 = vadd.f32 %v537, %v545
  %548 = vset.pattern.permute.xlu0 3
  %549 = vperm.xlu0 %548, %v520
  %v550 = vpop.permute.xlu0 %549
  %v552 = vmul.f32 %v550, %v21
  %554 = vrot.lane.b32.xlu0 %v552, 101
  %v555 = vpop.permute.xlu0 %554
  %v557 = vadd.f32 %v547, %v555
  %558 = vset.pattern.permute.xlu0 4
  %559 = vperm.xlu0 %558, %v520
  %v560 = vpop.permute.xlu0 %559
  %v562 = vmul.f32 %v560, %v21
  %564 = vrot.lane.b32.xlu0 %v562, 92
  %v565 = vpop.permute.xlu0 %564
  %v567 = vadd.f32 %v557, %v565
  %568 = vset.pattern.permute.xlu0 5
  %569 = vperm.xlu0 %568, %v520
  %v570 = vpop.permute.xlu0 %569
  %v572 = vmul.f32 %v570, %v21
  %574 = vrot.lane.b32.xlu0 %v572, 83
  %v575 = vpop.permute.xlu0 %574
  %v577 = vadd.f32 %v567, %v575
  %578 = vset.pattern.permute.xlu0 6
  %579 = vperm.xlu0 %578, %v520
  %v580 = vpop.permute.xlu0 %579
  %v582 = vmul.f32 %v580, %v21
  %584 = vrot.lane.b32.xlu0 %v582, 74
  %v585 = vpop.permute.xlu0 %584
  %v587 = vadd.f32 %v577, %v585
  %588 = vset.pattern.permute.xlu0 7
  %589 = vperm.xlu0 %588, %v520
  %v590 = vpop.permute.xlu0 %589
  %v592 = vmul.f32 %v590, %v21
  %594 = vrot.lane.b32.xlu0 %v592, 65
  %v595 = vpop.permute.xlu0 %594
  %v597 = vadd.f32 %v587, %v595
  %598 = vset.pattern.permute.xlu0 8
  %599 = vperm.xlu0 %598, %v520
  %v600 = vpop.permute.xlu0 %599
  %v602 = vmul.f32 %v600, %v21
  %604 = vrot.lane.b32.xlu0 %v602, 56
  %v605 = vpop.permute.xlu0 %604
  %v607 = vadd.f32 %v597, %v605
  %vm608 = vcmp.eq.s32.totalorder %v508, %v505
  %vm609 = vcmp.eq.s32.totalorder %v508, %v506
  %v610 = vsel %vm608, 1, 0
  %v611 = vsel %vm609, 1, 0
  %v612 = vcvt.s32.f32 %v610
  %v613 = vcvt.s32.f32 %v611
  %vm614 = vcmask 146504
  %v615 = vsel %vm614, %v503, -inf
  %616 = vmax.xlane.f32.xlu0 %v615
  %v617 = vpop.xlane.xlu0 %616
  %v618 = vsub.f32 %v503, %v617
  %v619 = vmul.f32 %v618, 1.442695
  %v620 = vpow.pop %v619
  %622 = vrot.lane.b32.xlu0 %v620, 119
  %v623 = vpop.permute.xlu0 %622
  %v625 = vsel %vm509, %v623, 0.0
  %626 = vadd.xlane.f32.xlu0 %v625
  %v627 = vpop.xlane.xlu0 %626
  %v628 = vrcp.pop %v627
  %v629 = vmul.f32 %v620, %v628
  %631 = vset.pattern.permute.xlu0 9
  %632 = vperm.xlu0 %631, %v629
  %v633 = vpop.permute.xlu0 %632
  %v635 = vmul.f32 %v633, %v21
  %v636 = vadd.f32 %v635, 0.0
  %637 = vset.pattern.permute.xlu0 10
  %638 = vperm.xlu0 %637, %v629
  %v639 = vpop.permute.xlu0 %638
  %v641 = vmul.f32 %v639, %v21
  %643 = vrot.lane.b32.xlu0 %v641, 119
  %v644 = vpop.permute.xlu0 %643
  %v646 = vadd.f32 %v636, %v644
  %647 = vset.pattern.permute.xlu0 11
  %648 = vperm.xlu0 %647, %v629
  %v649 = vpop.permute.xlu0 %648
  %v651 = vmul.f32 %v649, %v21
  %653 = vrot.lane.b32.xlu0 %v651, 110
  %v654 = vpop.permute.xlu0 %653
  %v656 = vadd.f32 %v646, %v654
  %657 = vset.pattern.permute.xlu0 12
  %658 = vperm.xlu0 %657, %v629
  %v659 = vpop.permute.xlu0 %658
  %v661 = vmul.f32 %v659, %v21
  %663 = vrot.lane.b32.xlu0 %v661, 101
  %v664 = vpop.permute.xlu0 %663
  %v666 = vadd.f32 %v656, %v664
  %667 = vset.pattern.permute.xlu0 13
  %668 = vperm.xlu0 %667, %v629
  %v669 = vpop.permute.xlu0 %668
  %v671 = vmul.f32 %v669, %v21
  %673 = vrot.lane.b32.xlu0 %v671, 92
  %v674 = vpop.permute.xlu0 %673
  %v676 = vadd.f32 %v666, %v674
  %677 = vset.pattern.permute.xlu0 14
  %678 = vperm.xlu0 %677, %v629
  %v679 = vpop.permute.xlu0 %678
  %v681 = vmul.f32 %v679, %v21
  %v682 = vmul.f32 %v679, %v22
  %685 = vrot.lane.b32.xlu0 %v681, 83
  %v686 = vpop.permute.xlu0 %685
  %687 = vrot.lane.b32.xlu0 %v682, 83
  %v688 = vpop.permute.xlu0 %687
  %vm689 = vcmask 678912
  %v690 = vsel %vm689, %v686, %v688
  %v692 = vadd.f32 %v676, %v690
  %693 = vset.pattern.permute.xlu0 15
  %694 = vperm.xlu0 %693, %v629
  %v695 = vpop.permute.xlu0 %694
  %v697 = vmul.f32 %v695, %v22
  %699 = vrot.lane.b32.xlu0 %v697, 74
  %v700 = vpop.permute.xlu0 %699
  %v702 = vadd.f32 %v692, %v700
  %703 = vset.pattern.permute.xlu0 16
  %704 = vperm.xlu0 %703, %v629
  %v705 = vpop.permute.xlu0 %704
  %v707 = vmul.f32 %v705, %v22
  %709 = vrot.lane.b32.xlu0 %v707, 65
  %v710 = vpop.permute.xlu0 %709
  %v712 = vadd.f32 %v702, %v710
  %713 = vset.pattern.permute.xlu0 17
  %714 = vperm.xlu0 %713, %v629
  %v715 = vpop.permute.xlu0 %714
  %v717 = vmul.f32 %v715, %v22
  %719 = vrot.lane.b32.xlu0 %v717, 56
  %v720 = vpop.permute.xlu0 %719
  %v722 = vadd.f32 %v712, %v720
  %v723 = vadd.s32 %v505, 9
  %v724 = vadd.s32 %v506, 9
  %vm725 = vcmp.eq.s32.totalorder %v508, %v723
  %vm726 = vcmp.eq.s32.totalorder %v508, %v724
  %v727 = vsel %vm725, 1, 0
  %v728 = vsel %vm726, 1, 0
  %v729 = vcvt.s32.f32 %v727
  %v730 = vcvt.s32.f32 %v728
  %732 = vrot.lane.b32.xlu0 %v722, 47
  %v733 = vpop.permute.xlu0 %732
  %v734 = vsel %vm509, %v733, 0
  %vm736 = vcmask 1040384
  %v738 = vsel %vm736, %v730, 0
  %740 = vmatpush.msra.mxu0 0.0
  %741 = vmatpush.msra.mxu0 0.0
  %742 = vmatpush.msra.mxu0 0.0
  %743 = vmatpush.msra.mxu0 0.0
  %744 = vmatpush.msra.mxu0 0.0
  %745 = vmatpush.msra.mxu0 0.0
  %746 = vmatpush.msra.mxu0 0.0
  %747 = vmatpush.msra.mxu0 0.0
  %748 = vmatpush.msra.mxu0 0.0
  %749 = vmatpush.msra.mxu0 0.0
  %750 = vmatpush.msra.mxu0 0.0
  %751 = vmatpush.msra.mxu0 0.0
  %752 = vmatpush.msra.mxu0 0.0
  %753 = vmatpush.msra.mxu0 0.0
  %754 = vmatpush.msra.mxu0 %v738
  %755 = vmatpush.msra.mxu0 %v729
  %756 = vmatmul.f32.gmra.mxu0 %v734
  %v757 = vpop.f32.mrf.mxu0
  %v758 = vadd.f32 0.0, %v757
  %759 = vdwg.mxu0
  %v761 = vsel %vm509, %v607, 0
  %v764 = vsel %vm736, %v613, 0
  %766 = vmatpush.msra.mxu0 0.0
  %767 = vmatpush.msra.mxu0 0.0
  %768 = vmatpush.msra.mxu0 0.0
  %769 = vmatpush.msra.mxu0 0.0
  %770 = vmatpush.msra.mxu0 0.0
  %771 = vmatpush.msra.mxu0 0.0
  %772 = vmatpush.msra.mxu0 0.0
  %773 = vmatpush.msra.mxu0 0.0
  %774 = vmatpush.msra.mxu0 0.0
  %775 = vmatpush.msra.mxu0 0.0
  %776 = vmatpush.msra.mxu0 0.0
  %777 = vmatpush.msra.mxu0 0.0
  %778 = vmatpush.msra.mxu0 0.0
  %779 = vmatpush.msra.mxu0 0.0
  %780 = vmatpush.msra.mxu0 %v764
  %781 = vmatpush.msra.mxu0 %v612
  %782 = vmatmul.f32.gmra.mxu0 %v761
  %v783 = vpop.f32.mrf.mxu0
  %v784 = vadd.f32 %v758, %v783
  %785 = vdwg.mxu0
  %vm786 = vcmask 220304
  %v787 = vsel %vm786, %v503, -inf
  %788 = vmax.xlane.f32.xlu0 %v787
  %v789 = vpop.xlane.xlu0 %788
  %v790 = vsub.f32 %v503, %v789
  %v791 = vmul.f32 %v790, 1.442695
  %v792 = vpow.pop %v791
  %794 = vrot.lane.b32.xlu0 %v792, 110
  %v795 = vpop.permute.xlu0 %794
  %v797 = vsel %vm509, %v795, 0.0
  %798 = vadd.xlane.f32.xlu0 %v797
  %v799 = vpop.xlane.xlu0 %798
  %v800 = vrcp.pop %v799
  %v801 = vmul.f32 %v792, %v800
  %803 = vset.pattern.permute.xlu0 18
  %804 = vperm.xlu0 %803, %v801
  %v805 = vpop.permute.xlu0 %804
  %v807 = vmul.f32 %v805, %v22
  %v808 = vadd.f32 %v807, 0.0
  %809 = vset.pattern.permute.xlu0 19
  %810 = vperm.xlu0 %809, %v801
  %v811 = vpop.permute.xlu0 %810
  %v813 = vmul.f32 %v811, %v22
  %815 = vrot.lane.b32.xlu0 %v813, 119
  %v816 = vpop.permute.xlu0 %815
  %v818 = vadd.f32 %v808, %v816
  %819 = vset.pattern.permute.xlu0 20
  %820 = vperm.xlu0 %819, %v801
  %v821 = vpop.permute.xlu0 %820
  %v823 = vmul.f32 %v821, %v22
  %825 = vrot.lane.b32.xlu0 %v823, 110
  %v826 = vpop.permute.xlu0 %825
  %v828 = vadd.f32 %v818, %v826
  %829 = vset.pattern.permute.xlu0 21
  %830 = vperm.xlu0 %829, %v801
  %v831 = vpop.permute.xlu0 %830
  %v833 = vmul.f32 %v831, %v22
  %835 = vrot.lane.b32.xlu0 %v833, 101
  %v836 = vpop.permute.xlu0 %835
  %v838 = vadd.f32 %v828, %v836
  %839 = vset.pattern.permute.xlu0 22
  %840 = vperm.xlu0 %839, %v801
  %v841 = vpop.permute.xlu0 %840
  %v843 = vmul.f32 %v841, %v22
  %845 = vrot.lane.b32.xlu0 %v843, 92
  %v846 = vpop.permute.xlu0 %845
  %v848 = vadd.f32 %v838, %v846
  %849 = vset.pattern.permute.xlu0 23
  %850 = vperm.xlu0 %849, %v801
  %v851 = vpop.permute.xlu0 %850
  %v853 = vmul.f32 %v851, %v22
  %855 = vrot.lane.b32.xlu0 %v853, 83
  %v856 = vpop.permute.xlu0 %855
  %v858 = vadd.f32 %v848, %v856
  %859 = vset.pattern.permute.xlu0 24
  %860 = vperm.xlu0 %859, %v801
  %v861 = vpop.permute.xlu0 %860
  %v863 = vmul.f32 %v861, %v22
  %865 = vrot.lane.b32.xlu0 %v863, 74
  %v866 = vpop.permute.xlu0 %865
  %v868 = vadd.f32 %v858, %v866
  %869 = vset.pattern.permute.xlu0 25
  %870 = vperm.xlu0 %869, %v801
  %v871 = vpop.permute.xlu0 %870
  %v873 = vmul.f32 %v871, %v22
  %875 = vrot.lane.b32.xlu0 %v873, 65
  %v876 = vpop.permute.xlu0 %875
  %v878 = vadd.f32 %v868, %v876
  %879 = vset.pattern.permute.xlu0 26
  %880 = vperm.xlu0 %879, %v801
  %v881 = vpop.permute.xlu0 %880
  %v883 = vmul.f32 %v881, %v22
  %885 = vrot.lane.b32.xlu0 %v883, 56
  %v886 = vpop.permute.xlu0 %885
  %v888 = vadd.f32 %v878, %v886
  %v889 = vadd.s32 %v505, 18
  %v890 = vadd.s32 %v506, 18
  %vm891 = vcmp.eq.s32.totalorder %v508, %v889
  %vm892 = vcmp.eq.s32.totalorder %v508, %v890
  %v893 = vsel %vm891, 1, 0
  %v894 = vsel %vm892, 1, 0
  %v895 = vcvt.s32.f32 %v893
  %v896 = vcvt.s32.f32 %v894
  %898 = vrot.lane.b32.xlu0 %v888, 94
  %v899 = vpop.permute.xlu0 %898
  %v900 = vsel %vm509, %v899, 0
  %v903 = vsel %vm736, %v896, 0
  %905 = vmatpush.msra.mxu0 0.0
  %906 = vmatpush.msra.mxu0 0.0
  %907 = vmatpush.msra.mxu0 0.0
  %908 = vmatpush.msra.mxu0 0.0
  %909 = vmatpush.msra.mxu0 0.0
  %910 = vmatpush.msra.mxu0 0.0
  %911 = vmatpush.msra.mxu0 0.0
  %912 = vmatpush.msra.mxu0 0.0
  %913 = vmatpush.msra.mxu0 0.0
  %914 = vmatpush.msra.mxu0 0.0
  %915 = vmatpush.msra.mxu0 0.0
  %916 = vmatpush.msra.mxu0 0.0
  %917 = vmatpush.msra.mxu0 0.0
  %918 = vmatpush.msra.mxu0 0.0
  %919 = vmatpush.msra.mxu0 %v903
  %920 = vmatpush.msra.mxu0 %v895
  %921 = vmatmul.f32.gmra.mxu0 %v900
  %v922 = vpop.f32.mrf.mxu0
  %v923 = vadd.f32 0.0, %v922
  %924 = vdwg.mxu0
  %v925 = vadd.f32 %v784, %v923
  %vm926 = vcmask 294104
  %v927 = vsel %vm926, %v503, -inf
  %928 = vmax.xlane.f32.xlu0 %v927
  %v929 = vpop.xlane.xlu0 %928
  %v930 = vsub.f32 %v503, %v929
  %v931 = vmul.f32 %v930, 1.442695
  %v932 = vpow.pop %v931
  %934 = vrot.lane.b32.xlu0 %v932, 101
  %v935 = vpop.permute.xlu0 %934
  %v937 = vsel %vm509, %v935, 0.0
  %938 = vadd.xlane.f32.xlu0 %v937
  %v939 = vpop.xlane.xlu0 %938
  %v940 = vrcp.pop %v939
  %v941 = vmul.f32 %v932, %v940
  %943 = vset.pattern.permute.xlu0 27
  %944 = vperm.xlu0 %943, %v941
  %v945 = vpop.permute.xlu0 %944
  %v947 = vmul.f32 %v945, %v22
  %v948 = vadd.f32 %v947, 0.0
  %949 = vset.pattern.permute.xlu0 28
  %950 = vperm.xlu0 %949, %v941
  %v951 = vpop.permute.xlu0 %950
  %v953 = vmul.f32 %v951, %v22
  %v954 = vmul.f32 %v951, %v23
  %957 = vrot.lane.b32.xlu0 %v953, 119
  %v958 = vpop.permute.xlu0 %957
  %959 = vrot.lane.b32.xlu0 %v954, 119
  %v960 = vpop.permute.xlu0 %959
  %vm961 = vcmask 973824
  %v962 = vsel %vm961, %v958, %v960
  %v964 = vadd.f32 %v948, %v962
  %965 = vset.pattern.permute.xlu0 29
  %966 = vperm.xlu0 %965, %v941
  %v967 = vpop.permute.xlu0 %966
  %v969 = vmul.f32 %v967, %v23
  %971 = vrot.lane.b32.xlu0 %v969, 110
  %v972 = vpop.permute.xlu0 %971
  %v974 = vadd.f32 %v964, %v972
  %975 = vset.pattern.permute.xlu0 30
  %976 = vperm.xlu0 %975, %v941
  %v977 = vpop.permute.xlu0 %976
  %v979 = vmul.f32 %v977, %v23
  %981 = vrot.lane.b32.xlu0 %v979, 101
  %v982 = vpop.permute.xlu0 %981
  %v984 = vadd.f32 %v974, %v982
  %985 = vset.pattern.permute.xlu0 31
  %986 = vperm.xlu0 %985, %v941
  %v987 = vpop.permute.xlu0 %986
  %v989 = vmul.f32 %v987, %v23
  %991 = vrot.lane.b32.xlu0 %v989, 92
  %v992 = vpop.permute.xlu0 %991
  %v994 = vadd.f32 %v984, %v992
  %995 = vset.pattern.permute.xlu0 32
  %996 = vperm.xlu0 %995, %v941
  %v997 = vpop.permute.xlu0 %996
  %v999 = vmul.f32 %v997, %v23
  %1001 = vrot.lane.b32.xlu0 %v999, 83
  %v1002 = vpop.permute.xlu0 %1001
  %v1004 = vadd.f32 %v994, %v1002
  %1005 = vset.pattern.permute.xlu0 33
  %1006 = vperm.xlu0 %1005, %v941
  %v1007 = vpop.permute.xlu0 %1006
  %v1009 = vmul.f32 %v1007, %v23
  %1011 = vrot.lane.b32.xlu0 %v1009, 74
  %v1012 = vpop.permute.xlu0 %1011
  %v1014 = vadd.f32 %v1004, %v1012
  %1015 = vset.pattern.permute.xlu0 34
  %1016 = vperm.xlu0 %1015, %v941
  %v1017 = vpop.permute.xlu0 %1016
  %v1019 = vmul.f32 %v1017, %v23
  %1021 = vrot.lane.b32.xlu0 %v1019, 65
  %v1022 = vpop.permute.xlu0 %1021
  %v1024 = vadd.f32 %v1014, %v1022
  %1025 = vset.pattern.permute.xlu0 35
  %1026 = vperm.xlu0 %1025, %v941
  %v1027 = vpop.permute.xlu0 %1026
  %v1029 = vmul.f32 %v1027, %v23
  %1031 = vrot.lane.b32.xlu0 %v1029, 56
  %v1032 = vpop.permute.xlu0 %1031
  %v1034 = vadd.f32 %v1024, %v1032
  %v1035 = vadd.s32 %v505, 27
  %v1036 = vadd.s32 %v506, 27
  %vm1037 = vcmp.eq.s32.totalorder %v508, %v1035
  %vm1038 = vcmp.eq.s32.totalorder %v508, %v1036
  %v1039 = vsel %vm1037, 1, 0
  %v1040 = vsel %vm1038, 1, 0
  %v1041 = vcvt.s32.f32 %v1039
  %v1042 = vcvt.s32.f32 %v1040
  %1044 = vrot.lane.b32.xlu0 %v1034, 13
  %v1045 = vpop.permute.xlu0 %1044
  %v1046 = vsel %vm509, %v1045, 0
  %v1049 = vsel %vm736, %v1042, 0
  %1051 = vmatpush.msra.mxu0 0.0
  %1052 = vmatpush.msra.mxu0 0.0
  %1053 = vmatpush.msra.mxu0 0.0
  %1054 = vmatpush.msra.mxu0 0.0
  %1055 = vmatpush.msra.mxu0 0.0
  %1056 = vmatpush.msra.mxu0 0.0
  %1057 = vmatpush.msra.mxu0 0.0
  %1058 = vmatpush.msra.mxu0 0.0
  %1059 = vmatpush.msra.mxu0 0.0
  %1060 = vmatpush.msra.mxu0 0.0
  %1061 = vmatpush.msra.mxu0 0.0
  %1062 = vmatpush.msra.mxu0 0.0
  %1063 = vmatpush.msra.mxu0 0.0
  %1064 = vmatpush.msra.mxu0 0.0
  %1065 = vmatpush.msra.mxu0 %v1049
  %1066 = vmatpush.msra.mxu0 %v1041
  %1067 = vmatmul.f32.gmra.mxu0 %v1046
  %v1068 = vpop.f32.mrf.mxu0
  %v1069 = vadd.f32 0.0, %v1068
  %1070 = vdwg.mxu0
  %v1071 = vadd.f32 %v925, %v1069
  %vm1072 = vcmask 367904
  %v1073 = vsel %vm1072, %v503, -inf
  %1074 = vmax.xlane.f32.xlu0 %v1073
  %v1075 = vpop.xlane.xlu0 %1074
  %v1076 = vsub.f32 %v503, %v1075
  %v1077 = vmul.f32 %v1076, 1.442695
  %v1078 = vpow.pop %v1077
  %1080 = vrot.lane.b32.xlu0 %v1078, 92
  %v1081 = vpop.permute.xlu0 %1080
  %v1083 = vsel %vm509, %v1081, 0.0
  %1084 = vadd.xlane.f32.xlu0 %v1083
  %v1085 = vpop.xlane.xlu0 %1084
  %v1086 = vrcp.pop %v1085
  %v1087 = vmul.f32 %v1078, %v1086
  %1089 = vset.pattern.permute.xlu0 36
  %1090 = vperm.xlu0 %1089, %v1087
  %v1091 = vpop.permute.xlu0 %1090
  %v1093 = vmul.f32 %v1091, %v23
  %v1094 = vadd.f32 %v1093, 0.0
  %1095 = vset.pattern.permute.xlu0 37
  %1096 = vperm.xlu0 %1095, %v1087
  %v1097 = vpop.permute.xlu0 %1096
  %v1099 = vmul.f32 %v1097, %v23
  %1101 = vrot.lane.b32.xlu0 %v1099, 119
  %v1102 = vpop.permute.xlu0 %1101
  %v1104 = vadd.f32 %v1094, %v1102
  %1105 = vset.pattern.permute.xlu0 38
  %1106 = vperm.xlu0 %1105, %v1087
  %v1107 = vpop.permute.xlu0 %1106
  %v1109 = vmul.f32 %v1107, %v23
  %1111 = vrot.lane.b32.xlu0 %v1109, 110
  %v1112 = vpop.permute.xlu0 %1111
  %v1114 = vadd.f32 %v1104, %v1112
  %1115 = vset.pattern.permute.xlu0 39
  %1116 = vperm.xlu0 %1115, %v1087
  %v1117 = vpop.permute.xlu0 %1116
  %v1119 = vmul.f32 %v1117, %v23
  %1121 = vrot.lane.b32.xlu0 %v1119, 101
  %v1122 = vpop.permute.xlu0 %1121
  %v1124 = vadd.f32 %v1114, %v1122
  %1125 = vset.pattern.permute.xlu0 40
  %1126 = vperm.xlu0 %1125, %v1087
  %v1127 = vpop.permute.xlu0 %1126
  %v1129 = vmul.f32 %v1127, %v23
  %1131 = vrot.lane.b32.xlu0 %v1129, 92
  %v1132 = vpop.permute.xlu0 %1131
  %v1134 = vadd.f32 %v1124, %v1132
  %1135 = vset.pattern.permute.xlu0 41
  %1136 = vperm.xlu0 %1135, %v1087
  %v1137 = vpop.permute.xlu0 %1136
  %v1139 = vmul.f32 %v1137, %v23
  %1141 = vrot.lane.b32.xlu0 %v1139, 83
  %v1142 = vpop.permute.xlu0 %1141
  %v1144 = vadd.f32 %v1134, %v1142
  %1145 = vset.pattern.permute.xlu0 42
  %1146 = vperm.xlu0 %1145, %v1087
  %v1147 = vpop.permute.xlu0 %1146
  %v1149 = vmul.f32 %v1147, %v23
  %v1150 = vmul.f32 %v1147, %v24
  %1153 = vrot.lane.b32.xlu0 %v1149, 74
  %v1154 = vpop.permute.xlu0 %1153
  %1155 = vrot.lane.b32.xlu0 %v1150, 74
  %v1156 = vpop.permute.xlu0 %1155
  %vm1157 = vcmask 605184
  %v1158 = vsel %vm1157, %v1154, %v1156
  %v1160 = vadd.f32 %v1144, %v1158
  %1161 = vset.pattern.permute.xlu0 43
  %1162 = vperm.xlu0 %1161, %v1087
  %v1163 = vpop.permute.xlu0 %1162
  %v1165 = vmul.f32 %v1163, %v24
  %1167 = vrot.lane.b32.xlu0 %v1165, 65
  %v1168 = vpop.permute.xlu0 %1167
  %v1170 = vadd.f32 %v1160, %v1168
  %1171 = vset.pattern.permute.xlu0 44
  %1172 = vperm.xlu0 %1171, %v1087
  %v1173 = vpop.permute.xlu0 %1172
  %v1175 = vmul.f32 %v1173, %v24
  %1177 = vrot.lane.b32.xlu0 %v1175, 56
  %v1178 = vpop.permute.xlu0 %1177
  %v1180 = vadd.f32 %v1170, %v1178
  %v1181 = vadd.s32 %v505, 36
  %v1182 = vadd.s32 %v506, 36
  %vm1183 = vcmp.eq.s32.totalorder %v508, %v1181
  %vm1184 = vcmp.eq.s32.totalorder %v508, %v1182
  %v1185 = vsel %vm1183, 1, 0
  %v1186 = vsel %vm1184, 1, 0
  %v1187 = vcvt.s32.f32 %v1185
  %v1188 = vcvt.s32.f32 %v1186
  %1190 = vrot.lane.b32.xlu0 %v1180, 60
  %v1191 = vpop.permute.xlu0 %1190
  %v1192 = vsel %vm509, %v1191, 0
  %v1195 = vsel %vm736, %v1188, 0
  %1197 = vmatpush.msra.mxu0 0.0
  %1198 = vmatpush.msra.mxu0 0.0
  %1199 = vmatpush.msra.mxu0 0.0
  %1200 = vmatpush.msra.mxu0 0.0
  %1201 = vmatpush.msra.mxu0 0.0
  %1202 = vmatpush.msra.mxu0 0.0
  %1203 = vmatpush.msra.mxu0 0.0
  %1204 = vmatpush.msra.mxu0 0.0
  %1205 = vmatpush.msra.mxu0 0.0
  %1206 = vmatpush.msra.mxu0 0.0
  %1207 = vmatpush.msra.mxu0 0.0
  %1208 = vmatpush.msra.mxu0 0.0
  %1209 = vmatpush.msra.mxu0 0.0
  %1210 = vmatpush.msra.mxu0 0.0
  %1211 = vmatpush.msra.mxu0 %v1195
  %1212 = vmatpush.msra.mxu0 %v1187
  %1213 = vmatmul.f32.gmra.mxu0 %v1192
  %v1214 = vpop.f32.mrf.mxu0
  %v1215 = vadd.f32 0.0, %v1214
  %1216 = vdwg.mxu0
  %v1217 = vadd.f32 %v1071, %v1215
  %vm1218 = vcmask 441704
  %v1219 = vsel %vm1218, %v503, -inf
  %1220 = vmax.xlane.f32.xlu0 %v1219
  %v1221 = vpop.xlane.xlu0 %1220
  %v1222 = vsub.f32 %v503, %v1221
  %v1223 = vmul.f32 %v1222, 1.442695
  %v1224 = vpow.pop %v1223
  %1226 = vrot.lane.b32.xlu0 %v1224, 83
  %v1227 = vpop.permute.xlu0 %1226
  %v1229 = vsel %vm509, %v1227, 0.0
  %1230 = vadd.xlane.f32.xlu0 %v1229
  %v1231 = vpop.xlane.xlu0 %1230
  %v1232 = vrcp.pop %v1231
  %v1233 = vmul.f32 %v1224, %v1232
  %1235 = vset.pattern.permute.xlu0 45
  %1236 = vperm.xlu0 %1235, %v1233
  %v1237 = vpop.permute.xlu0 %1236
  %v1239 = vmul.f32 %v1237, %v24
  %v1240 = vadd.f32 %v1239, 0.0
  %1241 = vset.pattern.permute.xlu0 46
  %1242 = vperm.xlu0 %1241, %v1233
  %v1243 = vpop.permute.xlu0 %1242
  %v1245 = vmul.f32 %v1243, %v24
  %1247 = vrot.lane.b32.xlu0 %v1245, 119
  %v1248 = vpop.permute.xlu0 %1247
  %v1250 = vadd.f32 %v1240, %v1248
  %1251 = vset.pattern.permute.xlu0 47
  %1252 = vperm.xlu0 %1251, %v1233
  %v1253 = vpop.permute.xlu0 %1252
  %v1255 = vmul.f32 %v1253, %v24
  %1257 = vrot.lane.b32.xlu0 %v1255, 110
  %v1258 = vpop.permute.xlu0 %1257
  %v1260 = vadd.f32 %v1250, %v1258
  %1261 = vset.pattern.permute.xlu0 48
  %1262 = vperm.xlu0 %1261, %v1233
  %v1263 = vpop.permute.xlu0 %1262
  %v1265 = vmul.f32 %v1263, %v24
  %1267 = vrot.lane.b32.xlu0 %v1265, 101
  %v1268 = vpop.permute.xlu0 %1267
  %v1270 = vadd.f32 %v1260, %v1268
  %1271 = vset.pattern.permute.xlu0 49
  %1272 = vperm.xlu0 %1271, %v1233
  %v1273 = vpop.permute.xlu0 %1272
  %v1275 = vmul.f32 %v1273, %v24
  %1277 = vrot.lane.b32.xlu0 %v1275, 92
  %v1278 = vpop.permute.xlu0 %1277
  %v1280 = vadd.f32 %v1270, %v1278
  %1281 = vset.pattern.permute.xlu0 50
  %1282 = vperm.xlu0 %1281, %v1233
  %v1283 = vpop.permute.xlu0 %1282
  %v1285 = vmul.f32 %v1283, %v24
  %1287 = vrot.lane.b32.xlu0 %v1285, 83
  %v1288 = vpop.permute.xlu0 %1287
  %v1290 = vadd.f32 %v1280, %v1288
  %1291 = vset.pattern.permute.xlu0 51
  %1292 = vperm.xlu0 %1291, %v1233
  %v1293 = vpop.permute.xlu0 %1292
  %v1295 = vmul.f32 %v1293, %v24
  %1297 = vrot.lane.b32.xlu0 %v1295, 74
  %v1298 = vpop.permute.xlu0 %1297
  %v1300 = vadd.f32 %v1290, %v1298
  %1301 = vset.pattern.permute.xlu0 52
  %1302 = vperm.xlu0 %1301, %v1233
  %v1303 = vpop.permute.xlu0 %1302
  %v1305 = vmul.f32 %v1303, %v24
  %1307 = vrot.lane.b32.xlu0 %v1305, 65
  %v1308 = vpop.permute.xlu0 %1307
  %v1310 = vadd.f32 %v1300, %v1308
  %1311 = vset.pattern.permute.xlu0 53
  %1312 = vperm.xlu0 %1311, %v1233
  %v1313 = vpop.permute.xlu0 %1312
  %v1315 = vmul.f32 %v1313, %v24
  %1317 = vrot.lane.b32.xlu0 %v1315, 56
  %v1318 = vpop.permute.xlu0 %1317
  %v1320 = vadd.f32 %v1310, %v1318
  %v1321 = vadd.s32 %v505, 45
  %v1322 = vadd.s32 %v506, 45
  %vm1323 = vcmp.eq.s32.totalorder %v508, %v1321
  %vm1324 = vcmp.eq.s32.totalorder %v508, %v1322
  %v1325 = vsel %vm1323, 1, 0
  %v1326 = vsel %vm1324, 1, 0
  %v1327 = vcvt.s32.f32 %v1325
  %v1328 = vcvt.s32.f32 %v1326
  %1330 = vrot.lane.b32.xlu0 %v1320, 107
  %v1331 = vpop.permute.xlu0 %1330
  %v1332 = vsel %vm509, %v1331, 0
  %v1335 = vsel %vm736, %v1328, 0
  %1337 = vmatpush.msra.mxu0 0.0
  %1338 = vmatpush.msra.mxu0 0.0
  %1339 = vmatpush.msra.mxu0 0.0
  %1340 = vmatpush.msra.mxu0 0.0
  %1341 = vmatpush.msra.mxu0 0.0
  %1342 = vmatpush.msra.mxu0 0.0
  %1343 = vmatpush.msra.mxu0 0.0
  %1344 = vmatpush.msra.mxu0 0.0
  %1345 = vmatpush.msra.mxu0 0.0
  %1346 = vmatpush.msra.mxu0 0.0
  %1347 = vmatpush.msra.mxu0 0.0
  %1348 = vmatpush.msra.mxu0 0.0
  %1349 = vmatpush.msra.mxu0 0.0
  %1350 = vmatpush.msra.mxu0 0.0
  %1351 = vmatpush.msra.mxu0 %v1335
  %1352 = vmatpush.msra.mxu0 %v1327
  %1353 = vmatmul.f32.gmra.mxu0 %v1332
  %v1354 = vpop.f32.mrf.mxu0
  %v1355 = vadd.f32 0.0, %v1354
  %1356 = vdwg.mxu0
  %v1357 = vadd.f32 %v1217, %v1355
  %vm1358 = vcmask 515504
  %v1359 = vsel %vm1358, %v503, -inf
  %1360 = vmax.xlane.f32.xlu0 %v1359
  %v1361 = vpop.xlane.xlu0 %1360
  %v1362 = vsub.f32 %v503, %v1361
  %v1363 = vmul.f32 %v1362, 1.442695
  %v1364 = vpow.pop %v1363
  %1366 = vrot.lane.b32.xlu0 %v1364, 74
  %v1367 = vpop.permute.xlu0 %1366
  %v1369 = vsel %vm509, %v1367, 0.0
  %1370 = vadd.xlane.f32.xlu0 %v1369
  %v1371 = vpop.xlane.xlu0 %1370
  %v1372 = vrcp.pop %v1371
  %v1373 = vmul.f32 %v1364, %v1372
  %1375 = vset.pattern.permute.xlu0 54
  %1376 = vperm.xlu0 %1375, %v1373
  %v1377 = vpop.permute.xlu0 %1376
  %v1379 = vmul.f32 %v1377, %v24
  %v1380 = vadd.f32 %v1379, 0.0
  %1381 = vset.pattern.permute.xlu0 55
  %1382 = vperm.xlu0 %1381, %v1373
  %v1383 = vpop.permute.xlu0 %1382
  %v1385 = vmul.f32 %v1383, %v24
  %1387 = vrot.lane.b32.xlu0 %v1385, 119
  %v1388 = vpop.permute.xlu0 %1387
  %v1390 = vadd.f32 %v1380, %v1388
  %1391 = vset.pattern.permute.xlu0 56
  %1392 = vperm.xlu0 %1391, %v1373
  %v1393 = vpop.permute.xlu0 %1392
  %v1395 = vmul.f32 %v1393, %v24
  %v1396 = vmul.f32 %v1393, %v25
  %1399 = vrot.lane.b32.xlu0 %v1395, 110
  %v1400 = vpop.permute.xlu0 %1399
  %1401 = vrot.lane.b32.xlu0 %v1396, 110
  %v1402 = vpop.permute.xlu0 %1401
  %vm1403 = vcmask 900096
  %v1404 = vsel %vm1403, %v1400, %v1402
  %v1406 = vadd.f32 %v1390, %v1404
  %1407 = vset.pattern.permute.xlu0 57
  %1408 = vperm.xlu0 %1407, %v1373
  %v1409 = vpop.permute.xlu0 %1408
  %v1411 = vmul.f32 %v1409, %v25
  %1413 = vrot.lane.b32.xlu0 %v1411, 101
  %v1414 = vpop.permute.xlu0 %1413
  %v1416 = vadd.f32 %v1406, %v1414
  %1417 = vset.pattern.permute.xlu0 58
  %1418 = vperm.xlu0 %1417, %v1373
  %v1419 = vpop.permute.xlu0 %1418
  %v1421 = vmul.f32 %v1419, %v25
  %1423 = vrot.lane.b32.xlu0 %v1421, 92
  %v1424 = vpop.permute.xlu0 %1423
  %v1426 = vadd.f32 %v1416, %v1424
  %1427 = vset.pattern.permute.xlu0 59
  %1428 = vperm.xlu0 %1427, %v1373
  %v1429 = vpop.permute.xlu0 %1428
  %v1431 = vmul.f32 %v1429, %v25
  %1433 = vrot.lane.b32.xlu0 %v1431, 83
  %v1434 = vpop.permute.xlu0 %1433
  %v1436 = vadd.f32 %v1426, %v1434
  %1437 = vset.pattern.permute.xlu0 60
  %1438 = vperm.xlu0 %1437, %v1373
  %v1439 = vpop.permute.xlu0 %1438
  %v1441 = vmul.f32 %v1439, %v25
  %1443 = vrot.lane.b32.xlu0 %v1441, 74
  %v1444 = vpop.permute.xlu0 %1443
  %v1446 = vadd.f32 %v1436, %v1444
  %1447 = vset.pattern.permute.xlu0 61
  %1448 = vperm.xlu0 %1447, %v1373
  %v1449 = vpop.permute.xlu0 %1448
  %v1451 = vmul.f32 %v1449, %v25
  %1453 = vrot.lane.b32.xlu0 %v1451, 65
  %v1454 = vpop.permute.xlu0 %1453
  %v1456 = vadd.f32 %v1446, %v1454
  %1457 = vset.pattern.permute.xlu0 62
  %1458 = vperm.xlu0 %1457, %v1373
  %v1459 = vpop.permute.xlu0 %1458
  %v1461 = vmul.f32 %v1459, %v25
  %1463 = vrot.lane.b32.xlu0 %v1461, 56
  %v1464 = vpop.permute.xlu0 %1463
  %v1466 = vadd.f32 %v1456, %v1464
  %v1467 = vadd.s32 %v505, 54
  %v1468 = vadd.s32 %v506, 54
  %vm1469 = vcmp.eq.s32.totalorder %v508, %v1467
  %vm1470 = vcmp.eq.s32.totalorder %v508, %v1468
  %v1471 = vsel %vm1469, 1, 0
  %v1472 = vsel %vm1470, 1, 0
  %v1473 = vcvt.s32.f32 %v1471
  %v1474 = vcvt.s32.f32 %v1472
  %1476 = vrot.lane.b32.xlu0 %v1466, 26
  %v1477 = vpop.permute.xlu0 %1476
  %v1478 = vsel %vm509, %v1477, 0
  %v1481 = vsel %vm736, %v1474, 0
  %1483 = vmatpush.msra.mxu0 0.0
  %1484 = vmatpush.msra.mxu0 0.0
  %1485 = vmatpush.msra.mxu0 0.0
  %1486 = vmatpush.msra.mxu0 0.0
  %1487 = vmatpush.msra.mxu0 0.0
  %1488 = vmatpush.msra.mxu0 0.0
  %1489 = vmatpush.msra.mxu0 0.0
  %1490 = vmatpush.msra.mxu0 0.0
  %1491 = vmatpush.msra.mxu0 0.0
  %1492 = vmatpush.msra.mxu0 0.0
  %1493 = vmatpush.msra.mxu0 0.0
  %1494 = vmatpush.msra.mxu0 0.0
  %1495 = vmatpush.msra.mxu0 0.0
  %1496 = vmatpush.msra.mxu0 0.0
  %1497 = vmatpush.msra.mxu0 %v1481
  %1498 = vmatpush.msra.mxu0 %v1473
  %1499 = vmatmul.f32.gmra.mxu0 %v1478
  %v1500 = vpop.f32.mrf.mxu0
  %v1501 = vadd.f32 0.0, %v1500
  %1502 = vdwg.mxu0
  %v1503 = vadd.f32 %v1357, %v1501
  %vm1504 = vcmask 589304
  %v1505 = vsel %vm1504, %v503, -inf
  %1506 = vmax.xlane.f32.xlu0 %v1505
  %v1507 = vpop.xlane.xlu0 %1506
  %v1508 = vsub.f32 %v503, %v1507
  %v1509 = vmul.f32 %v1508, 1.442695
  %v1510 = vpow.pop %v1509
  %1512 = vrot.lane.b32.xlu0 %v1510, 65
  %v1513 = vpop.permute.xlu0 %1512
  %v1515 = vsel %vm509, %v1513, 0.0
  %1516 = vadd.xlane.f32.xlu0 %v1515
  %v1517 = vpop.xlane.xlu0 %1516
  %v1518 = vrcp.pop %v1517
  %v1519 = vmul.f32 %v1510, %v1518
  %1521 = vset.pattern.permute.xlu0 63
  %1522 = vperm.xlu0 %1521, %v1519
  %v1523 = vpop.permute.xlu0 %1522
  %v1525 = vmul.f32 %v1523, %v25
  %v1526 = vadd.f32 %v1525, 0.0
  %1527 = vset.pattern.permute.xlu0 64
  %1528 = vperm.xlu0 %1527, %v1519
  %v1529 = vpop.permute.xlu0 %1528
  %v1531 = vmul.f32 %v1529, %v25
  %1533 = vrot.lane.b32.xlu0 %v1531, 119
  %v1534 = vpop.permute.xlu0 %1533
  %v1536 = vadd.f32 %v1526, %v1534
  %1537 = vset.pattern.permute.xlu0 65
  %1538 = vperm.xlu0 %1537, %v1519
  %v1539 = vpop.permute.xlu0 %1538
  %v1541 = vmul.f32 %v1539, %v25
  %1543 = vrot.lane.b32.xlu0 %v1541, 110
  %v1544 = vpop.permute.xlu0 %1543
  %v1546 = vadd.f32 %v1536, %v1544
  %1547 = vset.pattern.permute.xlu0 66
  %1548 = vperm.xlu0 %1547, %v1519
  %v1549 = vpop.permute.xlu0 %1548
  %v1551 = vmul.f32 %v1549, %v25
  %1553 = vrot.lane.b32.xlu0 %v1551, 101
  %v1554 = vpop.permute.xlu0 %1553
  %v1556 = vadd.f32 %v1546, %v1554
  %1557 = vset.pattern.permute.xlu0 67
  %1558 = vperm.xlu0 %1557, %v1519
  %v1559 = vpop.permute.xlu0 %1558
  %v1561 = vmul.f32 %v1559, %v25
  %1563 = vrot.lane.b32.xlu0 %v1561, 92
  %v1564 = vpop.permute.xlu0 %1563
  %v1566 = vadd.f32 %v1556, %v1564
  %1567 = vset.pattern.permute.xlu0 68
  %1568 = vperm.xlu0 %1567, %v1519
  %v1569 = vpop.permute.xlu0 %1568
  %v1571 = vmul.f32 %v1569, %v25
  %1573 = vrot.lane.b32.xlu0 %v1571, 83
  %v1574 = vpop.permute.xlu0 %1573
  %v1576 = vadd.f32 %v1566, %v1574
  %1577 = vset.pattern.permute.xlu0 69
  %1578 = vperm.xlu0 %1577, %v1519
  %v1579 = vpop.permute.xlu0 %1578
  %v1581 = vmul.f32 %v1579, %v25
  %1583 = vrot.lane.b32.xlu0 %v1581, 74
  %v1584 = vpop.permute.xlu0 %1583
  %v1586 = vadd.f32 %v1576, %v1584
  %1587 = vset.pattern.permute.xlu0 70
  %1588 = vperm.xlu0 %1587, %v1519
  %v1589 = vpop.permute.xlu0 %1588
  %v1591 = vmul.f32 %v1589, %v25
  %1593 = vrot.lane.b32.xlu0 %v1591, 65
  %v1594 = vpop.permute.xlu0 %1593
  %v1596 = vadd.f32 %v1586, %v1594
  %1597 = vset.pattern.permute.xlu0 71
  %1598 = vperm.xlu0 %1597, %v1519
  %v1599 = vpop.permute.xlu0 %1598
  %v1601 = vmul.f32 %v1599, %v25
  %v1602 = vmul.f32 %v1599, %v26
  %1605 = vrot.lane.b32.xlu0 %v1601, 56
  %v1606 = vpop.permute.xlu0 %1605
  %1607 = vrot.lane.b32.xlu0 %v1602, 56
  %v1608 = vpop.permute.xlu0 %1607
  %vm1609 = vcmask 457728
  %v1610 = vsel %vm1609, %v1606, %v1608
  %v1612 = vadd.f32 %v1596, %v1610
  %v1613 = vadd.s32 %v505, 63
  %v1614 = vadd.s32 %v506, 63
  %vm1615 = vcmp.eq.s32.totalorder %v508, %v1613
  %vm1616 = vcmp.eq.s32.totalorder %v508, %v1614
  %v1617 = vsel %vm1615, 1, 0
  %v1618 = vsel %vm1616, 1, 0
  %v1619 = vcvt.s32.f32 %v1617
  %v1620 = vcvt.s32.f32 %v1618
  %1622 = vrot.lane.b32.xlu0 %v1612, 73
  %v1623 = vpop.permute.xlu0 %1622
  %v1624 = vsel %vm509, %v1623, 0
  %v1627 = vsel %vm736, %v1620, 0
  %1629 = vmatpush.msra.mxu0 0.0
  %1630 = vmatpush.msra.mxu0 0.0
  %1631 = vmatpush.msra.mxu0 0.0
  %1632 = vmatpush.msra.mxu0 0.0
  %1633 = vmatpush.msra.mxu0 0.0
  %1634 = vmatpush.msra.mxu0 0.0
  %1635 = vmatpush.msra.mxu0 0.0
  %1636 = vmatpush.msra.mxu0 0.0
  %1637 = vmatpush.msra.mxu0 0.0
  %1638 = vmatpush.msra.mxu0 0.0
  %1639 = vmatpush.msra.mxu0 0.0
  %1640 = vmatpush.msra.mxu0 0.0
  %1641 = vmatpush.msra.mxu0 0.0
  %1642 = vmatpush.msra.mxu0 0.0
  %1643 = vmatpush.msra.mxu0 %v1627
  %1644 = vmatpush.msra.mxu0 %v1619
  %1645 = vmatmul.f32.gmra.mxu0 %v1624
  %v1646 = vpop.f32.mrf.mxu0
  %v1647 = vadd.f32 0.0, %v1646
  %1648 = vdwg.mxu0
  %v1649 = vadd.f32 %v1503, %v1647
  %vm1650 = vcmask 663104
  %v1651 = vsel %vm1650, %v503, -inf
  %1652 = vmax.xlane.f32.xlu0 %v1651
  %v1653 = vpop.xlane.xlu0 %1652
  %v1654 = vsub.f32 %v503, %v1653
  %v1655 = vmul.f32 %v1654, 1.442695
  %v1656 = vpow.pop %v1655
  %1658 = vrot.lane.b32.xlu0 %v1656, 56
  %v1659 = vpop.permute.xlu0 %1658
  %v1661 = vsel %vm509, %v1659, 0.0
  %1662 = vadd.xlane.f32.xlu0 %v1661
  %v1663 = vpop.xlane.xlu0 %1662
  %v1664 = vrcp.pop %v1663
  %v1665 = vmul.f32 %v1656, %v1664
  %1667 = vset.pattern.permute.xlu0 72
  %1668 = vperm.xlu0 %1667, %v1665
  %v1669 = vpop.permute.xlu0 %1668
  %v1671 = vmul.f32 %v1669, %v26
  %v1672 = vadd.f32 %v1671, 0.0
  %1673 = vset.pattern.permute.xlu0 73
  %1674 = vperm.xlu0 %1673, %v1665
  %v1675 = vpop.permute.xlu0 %1674
  %v1677 = vmul.f32 %v1675, %v26
  %1679 = vrot.lane.b32.xlu0 %v1677, 119
  %v1680 = vpop.permute.xlu0 %1679
  %v1682 = vadd.f32 %v1672, %v1680
  %1683 = vset.pattern.permute.xlu0 74
  %1684 = vperm.xlu0 %1683, %v1665
  %v1685 = vpop.permute.xlu0 %1684
  %v1687 = vmul.f32 %v1685, %v26
  %1689 = vrot.lane.b32.xlu0 %v1687, 110
  %v1690 = vpop.permute.xlu0 %1689
  %v1692 = vadd.f32 %v1682, %v1690
  %1693 = vset.pattern.permute.xlu0 75
  %1694 = vperm.xlu0 %1693, %v1665
  %v1695 = vpop.permute.xlu0 %1694
  %v1697 = vmul.f32 %v1695, %v26
  %1699 = vrot.lane.b32.xlu0 %v1697, 101
  %v1700 = vpop.permute.xlu0 %1699
  %v1702 = vadd.f32 %v1692, %v1700
  %1703 = vset.pattern.permute.xlu0 76
  %1704 = vperm.xlu0 %1703, %v1665
  %v1705 = vpop.permute.xlu0 %1704
  %v1707 = vmul.f32 %v1705, %v26
  %1709 = vrot.lane.b32.xlu0 %v1707, 92
  %v1710 = vpop.permute.xlu0 %1709
  %v1712 = vadd.f32 %v1702, %v1710
  %1713 = vset.pattern.permute.xlu0 77
  %1714 = vperm.xlu0 %1713, %v1665
  %v1715 = vpop.permute.xlu0 %1714
  %v1717 = vmul.f32 %v1715, %v26
  %1719 = vrot.lane.b32.xlu0 %v1717, 83
  %v1720 = vpop.permute.xlu0 %1719
  %v1722 = vadd.f32 %v1712, %v1720
  %1723 = vset.pattern.permute.xlu0 78
  %1724 = vperm.xlu0 %1723, %v1665
  %v1725 = vpop.permute.xlu0 %1724
  %v1727 = vmul.f32 %v1725, %v26
  %1729 = vrot.lane.b32.xlu0 %v1727, 74
  %v1730 = vpop.permute.xlu0 %1729
  %v1732 = vadd.f32 %v1722, %v1730
  %1733 = vset.pattern.permute.xlu0 79
  %1734 = vperm.xlu0 %1733, %v1665
  %v1735 = vpop.permute.xlu0 %1734
  %v1737 = vmul.f32 %v1735, %v26
  %1739 = vrot.lane.b32.xlu0 %v1737, 65
  %v1740 = vpop.permute.xlu0 %1739
  %v1742 = vadd.f32 %v1732, %v1740
  %1743 = vset.pattern.permute.xlu0 80
  %1744 = vperm.xlu0 %1743, %v1665
  %v1745 = vpop.permute.xlu0 %1744
  %v1747 = vmul.f32 %v1745, %v26
  %1749 = vrot.lane.b32.xlu0 %v1747, 56
  %v1750 = vpop.permute.xlu0 %1749
  %v1752 = vadd.f32 %v1742, %v1750
  %v1753 = vadd.s32 %v505, 72
  %v1754 = vadd.s32 %v506, 72
  %vm1755 = vcmp.eq.s32.totalorder %v508, %v1753
  %vm1756 = vcmp.eq.s32.totalorder %v508, %v1754
  %v1757 = vsel %vm1755, 1, 0
  %v1758 = vsel %vm1756, 1, 0
  %v1759 = vcvt.s32.f32 %v1757
  %v1760 = vcvt.s32.f32 %v1758
  %1762 = vrot.lane.b32.xlu0 %v1752, 120
  %v1763 = vpop.permute.xlu0 %1762
  %v1764 = vsel %vm509, %v1763, 0
  %v1767 = vsel %vm736, %v1760, 0
  %1769 = vmatpush.msra.mxu0 0.0
  %1770 = vmatpush.msra.mxu0 0.0
  %1771 = vmatpush.msra.mxu0 0.0
  %1772 = vmatpush.msra.mxu0 0.0
  %1773 = vmatpush.msra.mxu0 0.0
  %1774 = vmatpush.msra.mxu0 0.0
  %1775 = vmatpush.msra.mxu0 0.0
  %1776 = vmatpush.msra.mxu0 0.0
  %1777 = vmatpush.msra.mxu0 0.0
  %1778 = vmatpush.msra.mxu0 0.0
  %1779 = vmatpush.msra.mxu0 0.0
  %1780 = vmatpush.msra.mxu0 0.0
  %1781 = vmatpush.msra.mxu0 0.0
  %1782 = vmatpush.msra.mxu0 0.0
  %1783 = vmatpush.msra.mxu0 %v1767
  %1784 = vmatpush.msra.mxu0 %v1759
  %1785 = vmatmul.f32.gmra.mxu0 %v1764
  %v1786 = vpop.f32.mrf.mxu0
  %v1787 = vadd.f32 0.0, %v1786
  %1788 = vdwg.mxu0
  %v1789 = vadd.f32 %v1649, %v1787
  %1790 = vst [vmem:[%s5] sm:$0xff] %v1789
  // Predicated region
  $region22: #{attention_encoder_forward.1} parent=0 // pred_check
    _
  $region23: #{attention_encoder_forward.1} parent=0 // pred_check_branch
    %1792 = sbr.rel (0) target = $region25
  $region24: #{attention_encoder_forward.1} parent=0 // pred_region
    _
  $region25: #{attention_encoder_forward.1} parent=0 // pred_fallthru
    _
  // Predicated region
  $region26: #{attention_encoder_forward.1} parent=0 // pred_check
    _
  $region27: #{attention_encoder_forward.1} parent=0 // pred_check_branch
    %1794 = sbr.rel (0) target = $region29
  $region28: #{attention_encoder_forward.1} parent=0 // pred_region
    _
  $region29: #{attention_encoder_forward.1} parent=0 // pred_fallthru
    _

</llo_original>
